<compile_context>
chip_gen: v7x
topology: tpu7x:2x2x1
jax: 0.10.0
libtpu: 0.0.40
codegen_flags: <defaults>
</compile_context>

<pallas_src>
import functools

import jax
import jax.numpy as jnp
from jax.experimental import pallas as pl
from jax.experimental.pallas import tpu as pltpu

# SELU constants — identical to torch.nn.functional.selu
SELU_ALPHA = 1.6732632423543772
SELU_SCALE = 1.0507009873554805


def _round_up(x, m):
    return ((x + m - 1) // m) * m


def _selu(v):
    return SELU_SCALE * jnp.where(v > 0.0, v, SELU_ALPHA * (jnp.exp(v) - 1.0))


def _relu(v):
    return jnp.maximum(v, 0.0)


def _make_fused_kernel(n_layers, K, H, W, N, NP, CP, KKCP_B, hidden_activation):
    """Fused n_layers conv network. Activations are (CP, NP): channels on
    sublanes, flattened b*H*W (zero-padded to NP, lane-dense) on lanes."""
    KK = K * K
    KKCP = KK * CP
    pad = K // 2
    HW = H * W

    # Per-tap flat lane displacement d = dh*W + dw and the pltpu.roll shift
    # (jnp.roll convention: result[i] = x[(i - shift) % NP]) giving
    # shifted[p] == x[p + d]. Invalid (out-of-image / out-of-range) reads are
    # exactly the positions zeroed by the in-kernel tap masks.
    taps = []
    for kh in range(K):
        for kw in range(K):
            dh, dw = kh - pad, kw - pad
            taps.append((dh, dw, (-(dh * W + dw)) % NP))

    act_fn = _relu if hidden_activation == "relu" else _selu

    def _mod(p, m):
        # p mod (compile-time constant m); power-of-two -> bitwise AND (VPU-safe)
        if m & (m - 1) == 0:
            return jax.lax.bitwise_and(p, m - 1)
        # TODO(synk): non-power-of-two H/W relies on Mosaic i32 vector rem.
        return jax.lax.rem(p, m)

    def kernel(x_ref, w_ref, o_ref, patch_ref):
        # x_ref:     (CP, NP)            input activation
        # w_ref:     (L, CP, KKCP_B)     matmul-ready weights, bias folded in
        # o_ref:     (CP, NP)            last-layer output (row 0 = real channel)
        # patch_ref: (KKCP_B, NP) VMEM   streamed patch matrix scratch

        # Flat position per lane (identical on all sublanes); "same" padding
        # masks are generated in-register — no mask DMA, no sublane broadcast.
        p = jax.lax.broadcasted_iota(jnp.int32, (CP, NP), 1)
        hw = _mod(p, HW)          # y*W + x within one image
        xw = _mod(p, W)           # x within one row
        in_range = p < N          # lanes >= B*H*W are layout padding

        tap_ok = []
        for (dh, dw, _) in taps:
            ok = in_range
            if dh < 0:
                ok = ok & (hw >= (-dh) * W)
            elif dh > 0:
                ok = ok & (hw < (H - dh) * W)
            if dw < 0:
                ok = ok & (xw >= -dw)
            elif dw > 0:
                ok = ok & (xw < W - dw)
            tap_ok.append(ok)

        # Constant bias rows: row KKCP == 1 (multiplies the bias column of the
        # weights), remaining alignment rows == 0. Written once, reused by all
        # layers.
        r = jax.lax.broadcasted_iota(jnp.int32, (KKCP_B - KKCP, NP), 0)
        patch_ref[KKCP:, :] = jnp.where(r == 0, 1.0, 0.0)

        act = x_ref[...]
        for layer in range(n_layers):
            for t, (dh, dw, shift) in enumerate(taps):
                src = act if shift == 0 else pltpu.roll(act, shift=shift, axis=1)
                # jnp.where (not multiply): stale/non-finite padded values can
                # never leak into valid outputs.
                patch_ref[t * CP:(t + 1) * CP, :] = jnp.where(tap_ok[t], src, 0.0)
            # One MXU matmul per layer: (CP, KKCP_B) @ (KKCP_B, NP), bias folded.
            out = jnp.dot(w_ref[layer], patch_ref[...],
                          preferred_element_type=jnp.float32)
            act = _selu(out) if layer == n_layers - 1 else act_fn(out)
        o_ref[...] = act

    return kernel


def _prep_layer(w, b, CP, K, KKCP_B):
    """torch Conv2d weight (Cout, Cin, K, K), bias (Cout,) -> one matmul-ready
    (CP, KKCP_B) matrix with the bias folded into column KK*CP. Zero padding of
    channels is numerically neutral."""
    Cout, Cin, _, _ = w.shape
    KK = K * K
    w = jnp.pad(jnp.asarray(w, jnp.float32),
                ((0, CP - Cout), (0, CP - Cin), (0, 0), (0, 0)))
    # (CP, CP, K, K) -> (CP, K, K, CP) -> (CP, KK*CP); column index t*CP + cin
    # with t = kh*K + kw, matching the kernel's patch-row order.
    wm = jnp.transpose(w, (0, 2, 3, 1)).reshape(CP, KK * CP)
    bias_col = jnp.pad(jnp.asarray(b, jnp.float32), (0, CP - Cout)).reshape(CP, 1)
    tail = jnp.zeros((CP, KKCP_B - KK * CP - 1), jnp.float32)
    return jnp.concatenate([wm, bias_col, tail], axis=1)      # (CP, KKCP_B)


def init_params(key, n_hidden, n_in_chn, n_kernels, kernel_size):
    """Deterministic synthetic parameters with torch Conv2d shapes."""
    params = {"hidden": [], "out": None}
    cin = n_in_chn
    for _ in range(n_hidden):
        key, kw_key, kb_key = jax.random.split(key, 3)
        w = 0.1 * jax.random.normal(
            kw_key, (n_kernels, cin, kernel_size, kernel_size), jnp.float32)
        b = 0.1 * jax.random.normal(kb_key, (n_kernels,), jnp.float32)
        params["hidden"].append((w, b))
        cin = n_kernels
    key, kw_key, kb_key = jax.random.split(key, 3)
    w = 0.1 * jax.random.normal(
        kw_key, (1, cin, kernel_size, kernel_size), jnp.float32)
    b = 0.1 * jax.random.normal(kb_key, (1,), jnp.float32)
    params["out"] = (w, b)
    return params


def make_simple_cnn_forward(params, activation="relu"):
    """One-time setup (weight prep + kernel config); returns a jitted
    forward(x_nchw) -> (y (B,1,H,W), mask (B,H,W) bool) matching SimpleCNN."""
    activation = activation.lower()
    if activation not in ("relu", "selu"):
        raise NotImplementedError(f"Activation {activation} is not supported!")

    layers = list(params["hidden"]) + [params["out"]]
    n_layers = len(layers)
    K = int(layers[0][0].shape[-1])
    n_in_chn = int(layers[0][0].shape[1])
    CP = _round_up(max([n_in_chn] + [int(w.shape[0]) for (w, _) in layers]), 8)
    KKCP_B = K * K * CP + 8        # + 8-row block holding the constant bias row

    # Prepared once; captured by the jitted forward (no per-call prep ops).
    w_all = jnp.stack([_prep_layer(w, b, CP, K, KKCP_B) for (w, b) in layers])

    def forward(x_nchw):
        B, Cin0, H, W = x_nchw.shape
        if Cin0 < 2:
            # mask = x[:, 1] in the torch model silently requires n_in_chn >= 2
            raise ValueError("SimpleCNN.forward requires n_in_chn >= 2")
        mask = x_nchw[:, 1].astype(jnp.bool_)

        N = B * H * W
        NP = _round_up(N, 128)

        # NCHW -> (CP, NP): channels on sublanes, flattened b*h*w on lanes
        # (lane-dense so every kernel store is a full-width vst).
        x = jnp.transpose(x_nchw.astype(jnp.float32), (1, 0, 2, 3)).reshape(Cin0, N)
        x = jnp.pad(x, ((0, CP - Cin0), (0, NP - N)))

        kernel = _make_fused_kernel(
            n_layers, K, H, W, N, NP, CP, KKCP_B, activation)

        cost = pl.CostEstimate(
            flops=2 * n_layers * CP * KKCP_B * NP,
            transcendentals=CP * NP,
            bytes_accessed=4 * (2 * CP * NP + int(w_all.size)))

        out = pl.pallas_call(
            kernel,
            out_shape=jax.ShapeDtypeStruct((CP, NP), jnp.float32),
            grid=(1,),
            in_specs=[
                pl.BlockSpec((CP, NP), lambda i: (0, 0)),
                pl.BlockSpec((n_layers, CP, KKCP_B), lambda i: (0, 0, 0)),
            ],
            out_specs=pl.BlockSpec((CP, NP), lambda i: (0, 0)),
            scratch_shapes=[pltpu.VMEM((KKCP_B, NP), jnp.float32)],
            compiler_params=pltpu.CompilerParams(
                dimension_semantics=("arbitrary",)),
            cost_estimate=cost,
        )(x, w_all)

        # row 0 of (CP, NP) is the single real output channel
        y = out[0, :N].reshape(B, H, W)[:, None, :, :]        # (B, 1, H, W)
        return y, mask

    return jax.jit(forward)


def _reference_forward(x_nchw, params, activation):
    """Pure-JAX reference (lax.conv) for numerical validation."""
    act_fn = jax.nn.relu if activation == "relu" else jax.nn.selu

    def conv(x, w, b):
        y = jax.lax.conv_general_dilated(
            x, w.astype(jnp.float32), (1, 1), "SAME",
            dimension_numbers=("NCHW", "OIHW", "NCHW"),
            precision=jax.lax.Precision.HIGHEST)
        return y + b[None, :, None, None]

    x = x_nchw.astype(jnp.float32)
    for (w, b) in params["hidden"]:
        x = act_fn(conv(x, w, b))
    w, b = params["out"]
    x = jax.nn.selu(conv(x, w, b))
    return x, x_nchw[:, 1].astype(jnp.bool_)


if __name__ == "__main__":
    # SimpleCNN(n_hidden=2, n_in_chn=4, n_kernels=8, kernel_size=3, activation='relu')
    n_hidden, n_in_chn, n_kernels, kernel_size = 2, 4, 8, 3
    B, H, W = 2, 16, 16

    key = jax.random.PRNGKey(0)
    key, xkey = jax.random.split(key)
    x = jax.random.normal(xkey, (B, n_in_chn, H, W), jnp.float32)

    params = init_params(key, n_hidden, n_in_chn, n_kernels, kernel_size)

    fwd = make_simple_cnn_forward(params, activation="relu")
    out, mask = fwd(x)
    jax.block_until_ready(out)
    jax.block_until_ready(mask)

    assert out.shape == (B, 1, H, W) and out.dtype == jnp.float32
    assert mask.shape == (B, H, W) and mask.dtype == jnp.bool_

    ref_out, ref_mask = _reference_forward(x, params, "relu")
    max_err = float(jnp.max(jnp.abs(out - ref_out)))
    assert max_err < 2e-2, f"numerical mismatch vs reference: max_err={max_err}"
    assert bool(jnp.all(mask == ref_mask))

    print("KERNEL_OK")
</pallas_src>

<mosaic_0001>
module attributes {stable_mosaic.version = 11 : i64} {
  func.func @kernel(%arg0: i32, %arg1: memref<8x512xf32, #tpu.memory_space<vmem>>, %arg2: memref<3x8x80xf32, #tpu.memory_space<vmem>>, %arg3: memref<8x512xf32, #tpu.memory_space<vmem>>, %arg4: memref<80x512xf32, #tpu.memory_space<vmem>>) attributes {dimension_semantics = [#tpu.dimension_semantics<arbitrary>], iteration_bounds = array<i64: 1>, scalar_prefetch = 0 : i64, scratch_operands = 1 : i64, tpu.core_type = #tpu.core_type<tc>, window_params = [{pipeline_mode = #tpu.pipeline_mode<synchronous>, transform_indices = @transform_0, window_bounds = array<i64: 8, 512>}, {pipeline_mode = #tpu.pipeline_mode<synchronous>, transform_indices = @transform_1, window_bounds = array<i64: 3, 8, 80>}, {pipeline_mode = #tpu.pipeline_mode<synchronous>, transform_indices = @transform_2, window_bounds = array<i64: 8, 512>}]} {
    %0 = tpu.iota {dimensions = array<i32: 1>} : vector<8x512xi32>
    %c255_i32 = arith.constant 255 : i32
    %1 = vector.broadcast %c255_i32 : i32 to vector<8x512xi32>
    %2 = arith.andi %0, %1 : vector<8x512xi32>
    %c15_i32 = arith.constant 15 : i32
    %3 = vector.broadcast %c15_i32 : i32 to vector<8x512xi32>
    %4 = arith.andi %0, %3 : vector<8x512xi32>
    %c512_i32 = arith.constant 512 : i32
    %5 = vector.broadcast %c512_i32 : i32 to vector<8x512xi32>
    %6 = arith.cmpi slt, %0, %5 : vector<8x512xi32>
    %c16_i32 = arith.constant 16 : i32
    %7 = vector.broadcast %c16_i32 : i32 to vector<8x512xi32>
    %8 = arith.cmpi sge, %2, %7 : vector<8x512xi32>
    %9 = arith.andi %6, %8 : vector<8x512xi1>
    %c1_i32 = arith.constant 1 : i32
    %10 = vector.broadcast %c1_i32 : i32 to vector<8x512xi32>
    %11 = arith.cmpi sge, %4, %10 : vector<8x512xi32>
    %12 = arith.andi %9, %11 : vector<8x512xi1>
    %c16_i32_0 = arith.constant 16 : i32
    %13 = vector.broadcast %c16_i32_0 : i32 to vector<8x512xi32>
    %14 = arith.cmpi sge, %2, %13 : vector<8x512xi32>
    %15 = arith.andi %6, %14 : vector<8x512xi1>
    %c16_i32_1 = arith.constant 16 : i32
    %16 = vector.broadcast %c16_i32_1 : i32 to vector<8x512xi32>
    %17 = arith.cmpi sge, %2, %16 : vector<8x512xi32>
    %18 = arith.andi %6, %17 : vector<8x512xi1>
    %c15_i32_2 = arith.constant 15 : i32
    %19 = vector.broadcast %c15_i32_2 : i32 to vector<8x512xi32>
    %20 = arith.cmpi slt, %4, %19 : vector<8x512xi32>
    %21 = arith.andi %18, %20 : vector<8x512xi1>
    %c1_i32_3 = arith.constant 1 : i32
    %22 = vector.broadcast %c1_i32_3 : i32 to vector<8x512xi32>
    %23 = arith.cmpi sge, %4, %22 : vector<8x512xi32>
    %24 = arith.andi %6, %23 : vector<8x512xi1>
    %c15_i32_4 = arith.constant 15 : i32
    %25 = vector.broadcast %c15_i32_4 : i32 to vector<8x512xi32>
    %26 = arith.cmpi slt, %4, %25 : vector<8x512xi32>
    %27 = arith.andi %6, %26 : vector<8x512xi1>
    %c240_i32 = arith.constant 240 : i32
    %28 = vector.broadcast %c240_i32 : i32 to vector<8x512xi32>
    %29 = arith.cmpi slt, %2, %28 : vector<8x512xi32>
    %30 = arith.andi %6, %29 : vector<8x512xi1>
    %c1_i32_5 = arith.constant 1 : i32
    %31 = vector.broadcast %c1_i32_5 : i32 to vector<8x512xi32>
    %32 = arith.cmpi sge, %4, %31 : vector<8x512xi32>
    %33 = arith.andi %30, %32 : vector<8x512xi1>
    %c240_i32_6 = arith.constant 240 : i32
    %34 = vector.broadcast %c240_i32_6 : i32 to vector<8x512xi32>
    %35 = arith.cmpi slt, %2, %34 : vector<8x512xi32>
    %36 = arith.andi %6, %35 : vector<8x512xi1>
    %c240_i32_7 = arith.constant 240 : i32
    %37 = vector.broadcast %c240_i32_7 : i32 to vector<8x512xi32>
    %38 = arith.cmpi slt, %2, %37 : vector<8x512xi32>
    %39 = arith.andi %6, %38 : vector<8x512xi1>
    %c15_i32_8 = arith.constant 15 : i32
    %40 = vector.broadcast %c15_i32_8 : i32 to vector<8x512xi32>
    %41 = arith.cmpi slt, %4, %40 : vector<8x512xi32>
    %42 = arith.andi %39, %41 : vector<8x512xi1>
    %43 = tpu.iota {dimensions = array<i32: 0>} : vector<8x512xi32>
    %c0_i32 = arith.constant 0 : i32
    %44 = vector.broadcast %c0_i32 : i32 to vector<8x512xi32>
    %45 = arith.cmpi eq, %43, %44 : vector<8x512xi32>
    %cst = arith.constant 1.000000e+00 : f32
    %cst_9 = arith.constant 0.000000e+00 : f32
    %46 = vector.broadcast %cst : f32 to vector<8x512xf32>
    %47 = vector.broadcast %cst_9 : f32 to vector<8x512xf32>
    %48 = arith.select %45, %46, %47 : vector<8x512xi1>, vector<8x512xf32>
    %c72 = arith.constant 72 : index
    %c0 = arith.constant 0 : index
    %49 = vector.load %arg4[%c72, %c0] : memref<80x512xf32, #tpu.memory_space<vmem>>, vector<8x512xf32>
    tpu.vector_store %arg4[%c72, %c0], %48 {strides = array<i32>} : memref<80x512xf32, #tpu.memory_space<vmem>>, vector<8x512xf32>,
    %c0_10 = arith.constant 0 : index
    %c0_11 = arith.constant 0 : index
    %50 = vector.load %arg1[%c0_10, %c0_11] : memref<8x512xf32, #tpu.memory_space<vmem>>, vector<8x512xf32>
    %c17_i32 = arith.constant 17 : i32
    %51 = tpu.dynamic_rotate %50 by %c17_i32 dim 1 : vector<8x512xf32>, i32 -> vector<8x512xf32>
    %cst_12 = arith.constant 0.000000e+00 : f32
    %52 = vector.broadcast %cst_12 : f32 to vector<8x512xf32>
    %53 = arith.select %12, %51, %52 : vector<8x512xi1>, vector<8x512xf32>
    %c0_13 = arith.constant 0 : index
    %c0_14 = arith.constant 0 : index
    %54 = vector.load %arg4[%c0_13, %c0_14] : memref<80x512xf32, #tpu.memory_space<vmem>>, vector<8x512xf32>
    tpu.vector_store %arg4[%c0_13, %c0_14], %53 {strides = array<i32>} : memref<80x512xf32, #tpu.memory_space<vmem>>, vector<8x512xf32>,
    %c16_i32_15 = arith.constant 16 : i32
    %55 = tpu.dynamic_rotate %50 by %c16_i32_15 dim 1 : vector<8x512xf32>, i32 -> vector<8x512xf32>
    %cst_16 = arith.constant 0.000000e+00 : f32
    %56 = vector.broadcast %cst_16 : f32 to vector<8x512xf32>
    %57 = arith.select %15, %55, %56 : vector<8x512xi1>, vector<8x512xf32>
    %c8 = arith.constant 8 : index
    %c0_17 = arith.constant 0 : index
    %58 = vector.load %arg4[%c8, %c0_17] : memref<80x512xf32, #tpu.memory_space<vmem>>, vector<8x512xf32>
    tpu.vector_store %arg4[%c8, %c0_17], %57 {strides = array<i32>} : memref<80x512xf32, #tpu.memory_space<vmem>>, vector<8x512xf32>,
    %c15_i32_18 = arith.constant 15 : i32
    %59 = tpu.dynamic_rotate %50 by %c15_i32_18 dim 1 : vector<8x512xf32>, i32 -> vector<8x512xf32>
    %cst_19 = arith.constant 0.000000e+00 : f32
    %60 = vector.broadcast %cst_19 : f32 to vector<8x512xf32>
    %61 = arith.select %21, %59, %60 : vector<8x512xi1>, vector<8x512xf32>
    %c16 = arith.constant 16 : index
    %c0_20 = arith.constant 0 : index
    %62 = vector.load %arg4[%c16, %c0_20] : memref<80x512xf32, #tpu.memory_space<vmem>>, vector<8x512xf32>
    tpu.vector_store %arg4[%c16, %c0_20], %61 {strides = array<i32>} : memref<80x512xf32, #tpu.memory_space<vmem>>, vector<8x512xf32>,
    %c1_i32_21 = arith.constant 1 : i32
    %63 = tpu.dynamic_rotate %50 by %c1_i32_21 dim 1 : vector<8x512xf32>, i32 -> vector<8x512xf32>
    %cst_22 = arith.constant 0.000000e+00 : f32
    %64 = vector.broadcast %cst_22 : f32 to vector<8x512xf32>
    %65 = arith.select %24, %63, %64 : vector<8x512xi1>, vector<8x512xf32>
    %c24 = arith.constant 24 : index
    %c0_23 = arith.constant 0 : index
    %66 = vector.load %arg4[%c24, %c0_23] : memref<80x512xf32, #tpu.memory_space<vmem>>, vector<8x512xf32>
    tpu.vector_store %arg4[%c24, %c0_23], %65 {strides = array<i32>} : memref<80x512xf32, #tpu.memory_space<vmem>>, vector<8x512xf32>,
    %cst_24 = arith.constant 0.000000e+00 : f32
    %67 = vector.broadcast %cst_24 : f32 to vector<8x512xf32>
    %68 = arith.select %6, %50, %67 : vector<8x512xi1>, vector<8x512xf32>
    %c32 = arith.constant 32 : index
    %c0_25 = arith.constant 0 : index
    %69 = vector.load %arg4[%c32, %c0_25] : memref<80x512xf32, #tpu.memory_space<vmem>>, vector<8x512xf32>
    tpu.vector_store %arg4[%c32, %c0_25], %68 {strides = array<i32>} : memref<80x512xf32, #tpu.memory_space<vmem>>, vector<8x512xf32>,
    %c511_i32 = arith.constant 511 : i32
    %70 = tpu.dynamic_rotate %50 by %c511_i32 dim 1 : vector<8x512xf32>, i32 -> vector<8x512xf32>
    %cst_26 = arith.constant 0.000000e+00 : f32
    %71 = vector.broadcast %cst_26 : f32 to vector<8x512xf32>
    %72 = arith.select %27, %70, %71 : vector<8x512xi1>, vector<8x512xf32>
    %c40 = arith.constant 40 : index
    %c0_27 = arith.constant 0 : index
    %73 = vector.load %arg4[%c40, %c0_27] : memref<80x512xf32, #tpu.memory_space<vmem>>, vector<8x512xf32>
    tpu.vector_store %arg4[%c40, %c0_27], %72 {strides = array<i32>} : memref<80x512xf32, #tpu.memory_space<vmem>>, vector<8x512xf32>,
    %c497_i32 = arith.constant 497 : i32
    %74 = tpu.dynamic_rotate %50 by %c497_i32 dim 1 : vector<8x512xf32>, i32 -> vector<8x512xf32>
    %cst_28 = arith.constant 0.000000e+00 : f32
    %75 = vector.broadcast %cst_28 : f32 to vector<8x512xf32>
    %76 = arith.select %33, %74, %75 : vector<8x512xi1>, vector<8x512xf32>
    %c48 = arith.constant 48 : index
    %c0_29 = arith.constant 0 : index
    %77 = vector.load %arg4[%c48, %c0_29] : memref<80x512xf32, #tpu.memory_space<vmem>>, vector<8x512xf32>
    tpu.vector_store %arg4[%c48, %c0_29], %76 {strides = array<i32>} : memref<80x512xf32, #tpu.memory_space<vmem>>, vector<8x512xf32>,
    %c496_i32 = arith.constant 496 : i32
    %78 = tpu.dynamic_rotate %50 by %c496_i32 dim 1 : vector<8x512xf32>, i32 -> vector<8x512xf32>
    %cst_30 = arith.constant 0.000000e+00 : f32
    %79 = vector.broadcast %cst_30 : f32 to vector<8x512xf32>
    %80 = arith.select %36, %78, %79 : vector<8x512xi1>, vector<8x512xf32>
    %c56 = arith.constant 56 : index
    %c0_31 = arith.constant 0 : index
    %81 = vector.load %arg4[%c56, %c0_31] : memref<80x512xf32, #tpu.memory_space<vmem>>, vector<8x512xf32>
    tpu.vector_store %arg4[%c56, %c0_31], %80 {strides = array<i32>} : memref<80x512xf32, #tpu.memory_space<vmem>>, vector<8x512xf32>,
    %c495_i32 = arith.constant 495 : i32
    %82 = tpu.dynamic_rotate %50 by %c495_i32 dim 1 : vector<8x512xf32>, i32 -> vector<8x512xf32>
    %cst_32 = arith.constant 0.000000e+00 : f32
    %83 = vector.broadcast %cst_32 : f32 to vector<8x512xf32>
    %84 = arith.select %42, %82, %83 : vector<8x512xi1>, vector<8x512xf32>
    %c64 = arith.constant 64 : index
    %c0_33 = arith.constant 0 : index
    %85 = vector.load %arg4[%c64, %c0_33] : memref<80x512xf32, #tpu.memory_space<vmem>>, vector<8x512xf32>
    tpu.vector_store %arg4[%c64, %c0_33], %84 {strides = array<i32>} : memref<80x512xf32, #tpu.memory_space<vmem>>, vector<8x512xf32>,
    %c0_34 = arith.constant 0 : index
    %c0_35 = arith.constant 0 : index
    %c0_36 = arith.constant 0 : index
    %86 = vector.load %arg2[%c0_34, %c0_35, %c0_36] : memref<3x8x80xf32, #tpu.memory_space<vmem>>, vector<1x8x80xf32>
    %87 = vector.shape_cast %86 : vector<1x8x80xf32> to vector<8x80xf32>
    %c0_37 = arith.constant 0 : index
    %c0_38 = arith.constant 0 : index
    %88 = vector.load %arg4[%c0_37, %c0_38] : memref<80x512xf32, #tpu.memory_space<vmem>>, vector<80x512xf32>
    %cst_39 = arith.constant dense<0.000000e+00> : vector<8x512xf32>
    %89 = tpu.matmul %87, %88, %cst_39 {dimension_numbers = #tpu.dot_dimension_numbers<[1], [0], [0], [1], [0, 0, 1, 1], [], []>} : vector<8x80xf32>, vector<80x512xf32>, vector<8x512xf32> -> vector<8x512xf32>
    %cst_40 = arith.constant 0.000000e+00 : f32
    %90 = vector.broadcast %cst_40 : f32 to vector<8x512xf32>
    %91 = arith.maximumf %89, %90 : vector<8x512xf32>
    %c17_i32_41 = arith.constant 17 : i32
    %92 = tpu.dynamic_rotate %91 by %c17_i32_41 dim 1 : vector<8x512xf32>, i32 -> vector<8x512xf32>
    %cst_42 = arith.constant 0.000000e+00 : f32
    %93 = vector.broadcast %cst_42 : f32 to vector<8x512xf32>
    %94 = arith.select %12, %92, %93 : vector<8x512xi1>, vector<8x512xf32>
    %c0_43 = arith.constant 0 : index
    %c0_44 = arith.constant 0 : index
    %95 = vector.load %arg4[%c0_43, %c0_44] : memref<80x512xf32, #tpu.memory_space<vmem>>, vector<8x512xf32>
    tpu.vector_store %arg4[%c0_43, %c0_44], %94 {strides = array<i32>} : memref<80x512xf32, #tpu.memory_space<vmem>>, vector<8x512xf32>,
    %c16_i32_45 = arith.constant 16 : i32
    %96 = tpu.dynamic_rotate %91 by %c16_i32_45 dim 1 : vector<8x512xf32>, i32 -> vector<8x512xf32>
    %cst_46 = arith.constant 0.000000e+00 : f32
    %97 = vector.broadcast %cst_46 : f32 to vector<8x512xf32>
    %98 = arith.select %15, %96, %97 : vector<8x512xi1>, vector<8x512xf32>
    %c8_47 = arith.constant 8 : index
    %c0_48 = arith.constant 0 : index
    %99 = vector.load %arg4[%c8_47, %c0_48] : memref<80x512xf32, #tpu.memory_space<vmem>>, vector<8x512xf32>
    tpu.vector_store %arg4[%c8_47, %c0_48], %98 {strides = array<i32>} : memref<80x512xf32, #tpu.memory_space<vmem>>, vector<8x512xf32>,
    %c15_i32_49 = arith.constant 15 : i32
    %100 = tpu.dynamic_rotate %91 by %c15_i32_49 dim 1 : vector<8x512xf32>, i32 -> vector<8x512xf32>
    %cst_50 = arith.constant 0.000000e+00 : f32
    %101 = vector.broadcast %cst_50 : f32 to vector<8x512xf32>
    %102 = arith.select %21, %100, %101 : vector<8x512xi1>, vector<8x512xf32>
    %c16_51 = arith.constant 16 : index
    %c0_52 = arith.constant 0 : index
    %103 = vector.load %arg4[%c16_51, %c0_52] : memref<80x512xf32, #tpu.memory_space<vmem>>, vector<8x512xf32>
    tpu.vector_store %arg4[%c16_51, %c0_52], %102 {strides = array<i32>} : memref<80x512xf32, #tpu.memory_space<vmem>>, vector<8x512xf32>,
    %c1_i32_53 = arith.constant 1 : i32
    %104 = tpu.dynamic_rotate %91 by %c1_i32_53 dim 1 : vector<8x512xf32>, i32 -> vector<8x512xf32>
    %cst_54 = arith.constant 0.000000e+00 : f32
    %105 = vector.broadcast %cst_54 : f32 to vector<8x512xf32>
    %106 = arith.select %24, %104, %105 : vector<8x512xi1>, vector<8x512xf32>
    %c24_55 = arith.constant 24 : index
    %c0_56 = arith.constant 0 : index
    %107 = vector.load %arg4[%c24_55, %c0_56] : memref<80x512xf32, #tpu.memory_space<vmem>>, vector<8x512xf32>
    tpu.vector_store %arg4[%c24_55, %c0_56], %106 {strides = array<i32>} : memref<80x512xf32, #tpu.memory_space<vmem>>, vector<8x512xf32>,
    %cst_57 = arith.constant 0.000000e+00 : f32
    %108 = vector.broadcast %cst_57 : f32 to vector<8x512xf32>
    %109 = arith.select %6, %91, %108 : vector<8x512xi1>, vector<8x512xf32>
    %c32_58 = arith.constant 32 : index
    %c0_59 = arith.constant 0 : index
    %110 = vector.load %arg4[%c32_58, %c0_59] : memref<80x512xf32, #tpu.memory_space<vmem>>, vector<8x512xf32>
    tpu.vector_store %arg4[%c32_58, %c0_59], %109 {strides = array<i32>} : memref<80x512xf32, #tpu.memory_space<vmem>>, vector<8x512xf32>,
    %c511_i32_60 = arith.constant 511 : i32
    %111 = tpu.dynamic_rotate %91 by %c511_i32_60 dim 1 : vector<8x512xf32>, i32 -> vector<8x512xf32>
    %cst_61 = arith.constant 0.000000e+00 : f32
    %112 = vector.broadcast %cst_61 : f32 to vector<8x512xf32>
    %113 = arith.select %27, %111, %112 : vector<8x512xi1>, vector<8x512xf32>
    %c40_62 = arith.constant 40 : index
    %c0_63 = arith.constant 0 : index
    %114 = vector.load %arg4[%c40_62, %c0_63] : memref<80x512xf32, #tpu.memory_space<vmem>>, vector<8x512xf32>
    tpu.vector_store %arg4[%c40_62, %c0_63], %113 {strides = array<i32>} : memref<80x512xf32, #tpu.memory_space<vmem>>, vector<8x512xf32>,
    %c497_i32_64 = arith.constant 497 : i32
    %115 = tpu.dynamic_rotate %91 by %c497_i32_64 dim 1 : vector<8x512xf32>, i32 -> vector<8x512xf32>
    %cst_65 = arith.constant 0.000000e+00 : f32
    %116 = vector.broadcast %cst_65 : f32 to vector<8x512xf32>
    %117 = arith.select %33, %115, %116 : vector<8x512xi1>, vector<8x512xf32>
    %c48_66 = arith.constant 48 : index
    %c0_67 = arith.constant 0 : index
    %118 = vector.load %arg4[%c48_66, %c0_67] : memref<80x512xf32, #tpu.memory_space<vmem>>, vector<8x512xf32>
    tpu.vector_store %arg4[%c48_66, %c0_67], %117 {strides = array<i32>} : memref<80x512xf32, #tpu.memory_space<vmem>>, vector<8x512xf32>,
    %c496_i32_68 = arith.constant 496 : i32
    %119 = tpu.dynamic_rotate %91 by %c496_i32_68 dim 1 : vector<8x512xf32>, i32 -> vector<8x512xf32>
    %cst_69 = arith.constant 0.000000e+00 : f32
    %120 = vector.broadcast %cst_69 : f32 to vector<8x512xf32>
    %121 = arith.select %36, %119, %120 : vector<8x512xi1>, vector<8x512xf32>
    %c56_70 = arith.constant 56 : index
    %c0_71 = arith.constant 0 : index
    %122 = vector.load %arg4[%c56_70, %c0_71] : memref<80x512xf32, #tpu.memory_space<vmem>>, vector<8x512xf32>
    tpu.vector_store %arg4[%c56_70, %c0_71], %121 {strides = array<i32>} : memref<80x512xf32, #tpu.memory_space<vmem>>, vector<8x512xf32>,
    %c495_i32_72 = arith.constant 495 : i32
    %123 = tpu.dynamic_rotate %91 by %c495_i32_72 dim 1 : vector<8x512xf32>, i32 -> vector<8x512xf32>
    %cst_73 = arith.constant 0.000000e+00 : f32
    %124 = vector.broadcast %cst_73 : f32 to vector<8x512xf32>
    %125 = arith.select %42, %123, %124 : vector<8x512xi1>, vector<8x512xf32>
    %c64_74 = arith.constant 64 : index
    %c0_75 = arith.constant 0 : index
    %126 = vector.load %arg4[%c64_74, %c0_75] : memref<80x512xf32, #tpu.memory_space<vmem>>, vector<8x512xf32>
    tpu.vector_store %arg4[%c64_74, %c0_75], %125 {strides = array<i32>} : memref<80x512xf32, #tpu.memory_space<vmem>>, vector<8x512xf32>,
    %c1 = arith.constant 1 : index
    %c0_76 = arith.constant 0 : index
    %c0_77 = arith.constant 0 : index
    %127 = vector.load %arg2[%c1, %c0_76, %c0_77] : memref<3x8x80xf32, #tpu.memory_space<vmem>>, vector<1x8x80xf32>
    %128 = vector.shape_cast %127 : vector<1x8x80xf32> to vector<8x80xf32>
    %c0_78 = arith.constant 0 : index
    %c0_79 = arith.constant 0 : index
    %129 = vector.load %arg4[%c0_78, %c0_79] : memref<80x512xf32, #tpu.memory_space<vmem>>, vector<80x512xf32>
    %cst_80 = arith.constant dense<0.000000e+00> : vector<8x512xf32>
    %130 = tpu.matmul %128, %129, %cst_80 {dimension_numbers = #tpu.dot_dimension_numbers<[1], [0], [0], [1], [0, 0, 1, 1], [], []>} : vector<8x80xf32>, vector<80x512xf32>, vector<8x512xf32> -> vector<8x512xf32>
    %cst_81 = arith.constant 0.000000e+00 : f32
    %131 = vector.broadcast %cst_81 : f32 to vector<8x512xf32>
    %132 = arith.maximumf %130, %131 : vector<8x512xf32>
    %c17_i32_82 = arith.constant 17 : i32
    %133 = tpu.dynamic_rotate %132 by %c17_i32_82 dim 1 : vector<8x512xf32>, i32 -> vector<8x512xf32>
    %cst_83 = arith.constant 0.000000e+00 : f32
    %134 = vector.broadcast %cst_83 : f32 to vector<8x512xf32>
    %135 = arith.select %12, %133, %134 : vector<8x512xi1>, vector<8x512xf32>
    %c0_84 = arith.constant 0 : index
    %c0_85 = arith.constant 0 : index
    %136 = vector.load %arg4[%c0_84, %c0_85] : memref<80x512xf32, #tpu.memory_space<vmem>>, vector<8x512xf32>
    tpu.vector_store %arg4[%c0_84, %c0_85], %135 {strides = array<i32>} : memref<80x512xf32, #tpu.memory_space<vmem>>, vector<8x512xf32>,
    %c16_i32_86 = arith.constant 16 : i32
    %137 = tpu.dynamic_rotate %132 by %c16_i32_86 dim 1 : vector<8x512xf32>, i32 -> vector<8x512xf32>
    %cst_87 = arith.constant 0.000000e+00 : f32
    %138 = vector.broadcast %cst_87 : f32 to vector<8x512xf32>
    %139 = arith.select %15, %137, %138 : vector<8x512xi1>, vector<8x512xf32>
    %c8_88 = arith.constant 8 : index
    %c0_89 = arith.constant 0 : index
    %140 = vector.load %arg4[%c8_88, %c0_89] : memref<80x512xf32, #tpu.memory_space<vmem>>, vector<8x512xf32>
    tpu.vector_store %arg4[%c8_88, %c0_89], %139 {strides = array<i32>} : memref<80x512xf32, #tpu.memory_space<vmem>>, vector<8x512xf32>,
    %c15_i32_90 = arith.constant 15 : i32
    %141 = tpu.dynamic_rotate %132 by %c15_i32_90 dim 1 : vector<8x512xf32>, i32 -> vector<8x512xf32>
    %cst_91 = arith.constant 0.000000e+00 : f32
    %142 = vector.broadcast %cst_91 : f32 to vector<8x512xf32>
    %143 = arith.select %21, %141, %142 : vector<8x512xi1>, vector<8x512xf32>
    %c16_92 = arith.constant 16 : index
    %c0_93 = arith.constant 0 : index
    %144 = vector.load %arg4[%c16_92, %c0_93] : memref<80x512xf32, #tpu.memory_space<vmem>>, vector<8x512xf32>
    tpu.vector_store %arg4[%c16_92, %c0_93], %143 {strides = array<i32>} : memref<80x512xf32, #tpu.memory_space<vmem>>, vector<8x512xf32>,
    %c1_i32_94 = arith.constant 1 : i32
    %145 = tpu.dynamic_rotate %132 by %c1_i32_94 dim 1 : vector<8x512xf32>, i32 -> vector<8x512xf32>
    %cst_95 = arith.constant 0.000000e+00 : f32
    %146 = vector.broadcast %cst_95 : f32 to vector<8x512xf32>
    %147 = arith.select %24, %145, %146 : vector<8x512xi1>, vector<8x512xf32>
    %c24_96 = arith.constant 24 : index
    %c0_97 = arith.constant 0 : index
    %148 = vector.load %arg4[%c24_96, %c0_97] : memref<80x512xf32, #tpu.memory_space<vmem>>, vector<8x512xf32>
    tpu.vector_store %arg4[%c24_96, %c0_97], %147 {strides = array<i32>} : memref<80x512xf32, #tpu.memory_space<vmem>>, vector<8x512xf32>,
    %cst_98 = arith.constant 0.000000e+00 : f32
    %149 = vector.broadcast %cst_98 : f32 to vector<8x512xf32>
    %150 = arith.select %6, %132, %149 : vector<8x512xi1>, vector<8x512xf32>
    %c32_99 = arith.constant 32 : index
    %c0_100 = arith.constant 0 : index
    %151 = vector.load %arg4[%c32_99, %c0_100] : memref<80x512xf32, #tpu.memory_space<vmem>>, vector<8x512xf32>
    tpu.vector_store %arg4[%c32_99, %c0_100], %150 {strides = array<i32>} : memref<80x512xf32, #tpu.memory_space<vmem>>, vector<8x512xf32>,
    %c511_i32_101 = arith.constant 511 : i32
    %152 = tpu.dynamic_rotate %132 by %c511_i32_101 dim 1 : vector<8x512xf32>, i32 -> vector<8x512xf32>
    %cst_102 = arith.constant 0.000000e+00 : f32
    %153 = vector.broadcast %cst_102 : f32 to vector<8x512xf32>
    %154 = arith.select %27, %152, %153 : vector<8x512xi1>, vector<8x512xf32>
    %c40_103 = arith.constant 40 : index
    %c0_104 = arith.constant 0 : index
    %155 = vector.load %arg4[%c40_103, %c0_104] : memref<80x512xf32, #tpu.memory_space<vmem>>, vector<8x512xf32>
    tpu.vector_store %arg4[%c40_103, %c0_104], %154 {strides = array<i32>} : memref<80x512xf32, #tpu.memory_space<vmem>>, vector<8x512xf32>,
    %c497_i32_105 = arith.constant 497 : i32
    %156 = tpu.dynamic_rotate %132 by %c497_i32_105 dim 1 : vector<8x512xf32>, i32 -> vector<8x512xf32>
    %cst_106 = arith.constant 0.000000e+00 : f32
    %157 = vector.broadcast %cst_106 : f32 to vector<8x512xf32>
    %158 = arith.select %33, %156, %157 : vector<8x512xi1>, vector<8x512xf32>
    %c48_107 = arith.constant 48 : index
    %c0_108 = arith.constant 0 : index
    %159 = vector.load %arg4[%c48_107, %c0_108] : memref<80x512xf32, #tpu.memory_space<vmem>>, vector<8x512xf32>
    tpu.vector_store %arg4[%c48_107, %c0_108], %158 {strides = array<i32>} : memref<80x512xf32, #tpu.memory_space<vmem>>, vector<8x512xf32>,
    %c496_i32_109 = arith.constant 496 : i32
    %160 = tpu.dynamic_rotate %132 by %c496_i32_109 dim 1 : vector<8x512xf32>, i32 -> vector<8x512xf32>
    %cst_110 = arith.constant 0.000000e+00 : f32
    %161 = vector.broadcast %cst_110 : f32 to vector<8x512xf32>
    %162 = arith.select %36, %160, %161 : vector<8x512xi1>, vector<8x512xf32>
    %c56_111 = arith.constant 56 : index
    %c0_112 = arith.constant 0 : index
    %163 = vector.load %arg4[%c56_111, %c0_112] : memref<80x512xf32, #tpu.memory_space<vmem>>, vector<8x512xf32>
    tpu.vector_store %arg4[%c56_111, %c0_112], %162 {strides = array<i32>} : memref<80x512xf32, #tpu.memory_space<vmem>>, vector<8x512xf32>,
    %c495_i32_113 = arith.constant 495 : i32
    %164 = tpu.dynamic_rotate %132 by %c495_i32_113 dim 1 : vector<8x512xf32>, i32 -> vector<8x512xf32>
    %cst_114 = arith.constant 0.000000e+00 : f32
    %165 = vector.broadcast %cst_114 : f32 to vector<8x512xf32>
    %166 = arith.select %42, %164, %165 : vector<8x512xi1>, vector<8x512xf32>
    %c64_115 = arith.constant 64 : index
    %c0_116 = arith.constant 0 : index
    %167 = vector.load %arg4[%c64_115, %c0_116] : memref<80x512xf32, #tpu.memory_space<vmem>>, vector<8x512xf32>
    tpu.vector_store %arg4[%c64_115, %c0_116], %166 {strides = array<i32>} : memref<80x512xf32, #tpu.memory_space<vmem>>, vector<8x512xf32>,
    %c2 = arith.constant 2 : index
    %c0_117 = arith.constant 0 : index
    %c0_118 = arith.constant 0 : index
    %168 = vector.load %arg2[%c2, %c0_117, %c0_118] : memref<3x8x80xf32, #tpu.memory_space<vmem>>, vector<1x8x80xf32>
    %169 = vector.shape_cast %168 : vector<1x8x80xf32> to vector<8x80xf32>
    %c0_119 = arith.constant 0 : index
    %c0_120 = arith.constant 0 : index
    %170 = vector.load %arg4[%c0_119, %c0_120] : memref<80x512xf32, #tpu.memory_space<vmem>>, vector<80x512xf32>
    %cst_121 = arith.constant dense<0.000000e+00> : vector<8x512xf32>
    %171 = tpu.matmul %169, %170, %cst_121 {dimension_numbers = #tpu.dot_dimension_numbers<[1], [0], [0], [1], [0, 0, 1, 1], [], []>} : vector<8x80xf32>, vector<80x512xf32>, vector<8x512xf32> -> vector<8x512xf32>
    %cst_122 = arith.constant 0.000000e+00 : f32
    %172 = vector.broadcast %cst_122 : f32 to vector<8x512xf32>
    %173 = arith.cmpf ogt, %171, %172 : vector<8x512xf32>
    %174 = math.exp %171 : vector<8x512xf32>
    %cst_123 = arith.constant 1.000000e+00 : f32
    %175 = vector.broadcast %cst_123 : f32 to vector<8x512xf32>
    %176 = arith.subf %174, %175 : vector<8x512xf32>
    %cst_124 = arith.constant 1.67326319 : f32
    %177 = vector.broadcast %cst_124 : f32 to vector<8x512xf32>
    %178 = arith.mulf %177, %176 : vector<8x512xf32>
    %179 = arith.select %173, %171, %178 : vector<8x512xi1>, vector<8x512xf32>
    %cst_125 = arith.constant 1.05070102 : f32
    %180 = vector.broadcast %cst_125 : f32 to vector<8x512xf32>
    %181 = arith.mulf %180, %179 : vector<8x512xf32>
    %c0_126 = arith.constant 0 : index
    %c0_127 = arith.constant 0 : index
    %182 = vector.load %arg3[%c0_126, %c0_127] : memref<8x512xf32, #tpu.memory_space<vmem>>, vector<8x512xf32>
    tpu.vector_store %arg3[%c0_126, %c0_127], %181 {strides = array<i32>} : memref<8x512xf32, #tpu.memory_space<vmem>>, vector<8x512xf32>,
    return
  }
  func.func @transform_0(%arg0: i32) -> (i32, i32) {
    %c0_i32 = arith.constant 0 : i32
    %c0_i32_0 = arith.constant 0 : i32
    %c0_i32_1 = arith.constant 0 : i32
    return %c0_i32, %c0_i32_0 : i32, i32
  }
  func.func @transform_1(%arg0: i32) -> (i32, i32, i32) {
    %c0_i32 = arith.constant 0 : i32
    %c0_i32_0 = arith.constant 0 : i32
    %c0_i32_1 = arith.constant 0 : i32
    %c0_i32_2 = arith.constant 0 : i32
    return %c0_i32, %c0_i32_0, %c0_i32_1 : i32, i32, i32
  }
  func.func @transform_2(%arg0: i32) -> (i32, i32) {
    %c0_i32 = arith.constant 0 : i32
    %c0_i32_0 = arith.constant 0 : i32
    %c0_i32_1 = arith.constant 0 : i32
    return %c0_i32, %c0_i32_0 : i32, i32
  }
}

</mosaic_0001>

<llo_original>
// kernel: squeeze.3
$region0: #{squeeze.3}
  %s0 = inlined_call_operand.vmem [shape: f32[512], index: 0, kind: input, shape index: {}]
  %s1 = inlined_call_operand.hbm [shape: f32[2,1,16,16], index: 1, kind: output, shape index: {}]
  $region1: #{squeeze.3} parent=0
    #allocation0 [shape = 'u8[16384]{0}', space=vmem, size = 0x4000, scoped, tag = 'operand span for operand 1']
    #allocation1 [shape = 's32[1]{0}', space=sflag, size = 0x4, scoped, tag = 'scoped memory for squeeze.3']
    #allocation2 [shape = 'u8[4096]{0}', space=vmem, size = 0x1000, scoped, tag = 'scoped mem for input reshape']
    %2 = vsyncpa [#allocation1], 0
    %s4 = sshllo.u32 0, 4
    %v5 = vld [vmem:[%s0] sm:%s4]
    %6 = vst [vmem:[#allocation2] sm:%s4] %v5
    %v7 = vld [vmem:[#allocation2] sm:$0xf]
    %vm8 = vcmask 130048
    %9 = vst.msk [vmem:[#allocation0] ss:$8 sm:$0xf] %vm8, %v7
    %v10 = vld [vmem:[#allocation2] sm:$0xf]
    %11 = vrot.lane.b32.xlu0 %v10, 112
    %v12 = vpop.permute.xlu0 %11
    %vm13 = vcmask 130048
    %s14 = scalar_lea.vmem [#allocation0], 1
    %15 = vst.msk [vmem:[%s14] ss:$8 sm:$0xf] %vm13, %v12
    %v16 = vld [vmem:[#allocation2] sm:$0xf]
    %17 = vrot.lane.b32.xlu0 %v16, 96
    %v18 = vpop.permute.xlu0 %17
    %vm19 = vcmask 130048
    %s20 = scalar_lea.vmem [#allocation0], 2
    %21 = vst.msk [vmem:[%s20] ss:$8 sm:$0xf] %vm19, %v18
    %v22 = vld [vmem:[#allocation2] sm:$0xf]
    %23 = vrot.lane.b32.xlu0 %v22, 80
    %v24 = vpop.permute.xlu0 %23
    %vm25 = vcmask 130048
    %s26 = scalar_lea.vmem [#allocation0], 3
    %27 = vst.msk [vmem:[%s26] ss:$8 sm:$0xf] %vm25, %v24
    %v28 = vld [vmem:[#allocation2] sm:$0xf]
    %29 = vrot.lane.b32.xlu0 %v28, 64
    %v30 = vpop.permute.xlu0 %29
    %vm31 = vcmask 130048
    %s32 = scalar_lea.vmem [#allocation0], 4
    %33 = vst.msk [vmem:[%s32] ss:$8 sm:$0xf] %vm31, %v30
    %v34 = vld [vmem:[#allocation2] sm:$0xf]
    %35 = vrot.lane.b32.xlu0 %v34, 48
    %v36 = vpop.permute.xlu0 %35
    %vm37 = vcmask 130048
    %s38 = scalar_lea.vmem [#allocation0], 5
    %39 = vst.msk [vmem:[%s38] ss:$8 sm:$0xf] %vm37, %v36
    %v40 = vld [vmem:[#allocation2] sm:$0xf]
    %41 = vrot.lane.b32.xlu0 %v40, 32
    %v42 = vpop.permute.xlu0 %41
    %vm43 = vcmask 130048
    %s44 = scalar_lea.vmem [#allocation0], 6
    %45 = vst.msk [vmem:[%s44] ss:$8 sm:$0xf] %vm43, %v42
    %v46 = vld [vmem:[#allocation2] sm:$0xf]
    %47 = vrot.lane.b32.xlu0 %v46, 16
    %v48 = vpop.permute.xlu0 %47
    %vm49 = vcmask 130048
    %s50 = scalar_lea.vmem [#allocation0], 7
    %51 = vst.msk [vmem:[%s50] ss:$8 sm:$0xf] %vm49, %v48
    %s53 = ssub.s32 512, 512
    %54 = vsyncadd [#allocation1], %s53
    %s56 = sshll.u32 [#allocation0], 4
    %s57 = int_to_ptr.vmem [resolvable:$true] %s56
    %59 = dma.vmem_to_hbm [thread:$0]  %s57, 512, %s1, [#allocation1]
    %60 = dma.done [#allocation1], 512
    %61 = vsyncpa [#allocation1], 1

// kernel: forward.1
$region0: #{forward.1}
  #allocation0 [shape = 'u32[]', space=smem, size = 0x4, offset = 0x4, fixed_abs, tag = 'smem constant byte address 0x4 - core index']
  #allocation1 [shape = 'u32[144,128]{1,0:T(1,128)}', space=vmem, size = 0x12000, scoped, tag = 'internal scratch']
  #allocation2 [shape = 'f32[80,512]{1,0:T(8,128)}', space=vmem, size = 0x28000, scoped, tag = 'scratch operand']
  %s0 = inlined_call_operand.vmem [shape: f32[8,512], index: 0, kind: input, shape index: {}]
  %s1 = inlined_call_operand.vmem [shape: f32[3,8,80], index: 1, kind: input, shape index: {}]
  %s2 = inlined_call_operand.vmem [shape: f32[8,512], index: 2, kind: output, shape index: {}]
  %s3 = sld [smem:[#allocation0]]
  $region18: #{forward.1} parent=0
    _
  %s5 = ssub.s32 1, %s3
  %s6 = scalar_select 0, %s5, %s3
  // Predicated region
  $region2: #{forward.1} parent=0 // pred_check
    _
  $region3: #{forward.1} parent=0 // pred_check_branch
    %8 = sbr.rel (0) target = $region5
  $region4: #{forward.1} parent=0 // pred_region
    _
  $region5: #{forward.1} parent=0 // pred_fallthru
    _
  // Predicated region
  $region6: #{forward.1} parent=0 // pred_check
    _
  $region7: #{forward.1} parent=0 // pred_check_branch
    %10 = sbr.rel (0) target = $region9
  $region8: #{forward.1} parent=0 // pred_region
    _
  $region9: #{forward.1} parent=0 // pred_fallthru
    _
  %v11 = vlaneseq
  %v12 = vand.u32 %v11, 127
  %v13 = vadd.s32 %v12, 128
  %v14 = vadd.s32 %v12, 256
  %v15 = vadd.s32 %v12, 384
  %v16 = vand.u32 %v12, 255
  %v17 = vand.u32 %v13, 255
  %v18 = vand.u32 %v14, 255
  %v19 = vand.u32 %v15, 255
  %v20 = vand.u32 %v12, 15
  %v21 = vand.u32 %v13, 15
  %v22 = vand.u32 %v14, 15
  %v23 = vand.u32 %v15, 15
  %vm24 = vcmp.lt.s32.totalorder %v12, 512
  %vm25 = vcmp.lt.s32.totalorder %v13, 512
  %vm26 = vcmp.lt.s32.totalorder %v14, 512
  %vm27 = vcmp.lt.s32.totalorder %v15, 512
  %vm28 = vcmp.ge.s32.totalorder %v16, 16
  %vm29 = vcmp.ge.s32.totalorder %v17, 16
  %vm30 = vcmp.ge.s32.totalorder %v18, 16
  %vm31 = vcmp.ge.s32.totalorder %v19, 16
  %vm32 = vmand %vm24, %vm28
  %vm33 = vmand %vm25, %vm29
  %vm34 = vmand %vm26, %vm30
  %vm35 = vmand %vm27, %vm31
  %vm36 = vcmp.ge.s32.totalorder %v20, 1
  %vm37 = vcmp.ge.s32.totalorder %v21, 1
  %vm38 = vcmp.ge.s32.totalorder %v22, 1
  %vm39 = vcmp.ge.s32.totalorder %v23, 1
  %vm40 = vmand %vm32, %vm36
  %vm41 = vmand %vm33, %vm37
  %vm42 = vmand %vm34, %vm38
  %vm43 = vmand %vm35, %vm39
  %vm44 = vcmp.lt.s32.totalorder %v20, 15
  %vm45 = vcmp.lt.s32.totalorder %v21, 15
  %vm46 = vcmp.lt.s32.totalorder %v22, 15
  %vm47 = vcmp.lt.s32.totalorder %v23, 15
  %vm48 = vmand %vm32, %vm44
  %vm49 = vmand %vm33, %vm45
  %vm50 = vmand %vm34, %vm46
  %vm51 = vmand %vm35, %vm47
  %vm52 = vmand %vm24, %vm36
  %vm53 = vmand %vm25, %vm37
  %vm54 = vmand %vm26, %vm38
  %vm55 = vmand %vm27, %vm39
  %vm56 = vmand %vm24, %vm44
  %vm57 = vmand %vm25, %vm45
  %vm58 = vmand %vm26, %vm46
  %vm59 = vmand %vm27, %vm47
  %vm60 = vcmp.lt.s32.totalorder %v16, 240
  %vm61 = vcmp.lt.s32.totalorder %v17, 240
  %vm62 = vcmp.lt.s32.totalorder %v18, 240
  %vm63 = vcmp.lt.s32.totalorder %v19, 240
  %vm64 = vmand %vm24, %vm60
  %vm65 = vmand %vm25, %vm61
  %vm66 = vmand %vm26, %vm62
  %vm67 = vmand %vm27, %vm63
  %vm68 = vmand %vm64, %vm36
  %vm69 = vmand %vm65, %vm37
  %vm70 = vmand %vm66, %vm38
  %vm71 = vmand %vm67, %vm39
  %vm72 = vmand %vm64, %vm44
  %vm73 = vmand %vm65, %vm45
  %vm74 = vmand %vm66, %vm46
  %vm75 = vmand %vm67, %vm47
  %v76 = vlaneseq
  %v77 = vshrl.u32 %v76, 7
  %vm78 = vcmp.eq.s32.totalorder %v77, 0
  %v79 = vsel %vm78, 1.0, 0.0
  %80 = vst [vmem:[#allocation2 + $0x120] sm:$0xff] %v79
  %81 = vst [vmem:[#allocation2 + $0x128] sm:$0xff] %v79
  %82 = vst [vmem:[#allocation2 + $0x130] sm:$0xff] %v79
  %83 = vst [vmem:[#allocation2 + $0x138] sm:$0xff] %v79
  %v84 = vld [vmem:[%s0] sm:$0xff]
  %v85 = vld [vmem:[%s0 + $0x8] sm:$0xff]
  %v86 = vld [vmem:[%s0 + $0x10] sm:$0xff]
  %v87 = vld [vmem:[%s0 + $0x18] sm:$0xff]
  %88 = vrot.lane.b32.xlu0 %v84, 17
  %v89 = vpop.permute.xlu0 %88
  %90 = vrot.lane.b32.xlu0 %v85, 17
  %v91 = vpop.permute.xlu0 %90
  %92 = vrot.lane.b32.xlu0 %v86, 17
  %v93 = vpop.permute.xlu0 %92
  %94 = vrot.lane.b32.xlu0 %v87, 17
  %v95 = vpop.permute.xlu0 %94
  %vm96 = vcmp.lt.s32.totalorder %v12, 17
  %v97 = vsel %vm96, %v93, %v95
  %v98 = vsel %vm96, %v91, %v93
  %v99 = vsel %vm96, %v89, %v91
  %v100 = vsel %vm96, %v95, %v89
  %v101 = vsel %vm40, %v100, 0.0
  %v102 = vsel %vm41, %v99, 0.0
  %v103 = vsel %vm42, %v98, 0.0
  %v104 = vsel %vm43, %v97, 0.0
  %105 = vst [vmem:[#allocation2] sm:$0xff] %v101
  %106 = vst [vmem:[#allocation2 + $0x8] sm:$0xff] %v102
  %107 = vst [vmem:[#allocation2 + $0x10] sm:$0xff] %v103
  %108 = vst [vmem:[#allocation2 + $0x18] sm:$0xff] %v104
  %109 = vrot.lane.b32.xlu0 %v84, 16
  %v110 = vpop.permute.xlu0 %109
  %111 = vrot.lane.b32.xlu0 %v85, 16
  %v112 = vpop.permute.xlu0 %111
  %113 = vrot.lane.b32.xlu0 %v86, 16
  %v114 = vpop.permute.xlu0 %113
  %115 = vrot.lane.b32.xlu0 %v87, 16
  %v116 = vpop.permute.xlu0 %115
  %vm117 = vcmp.lt.s32.totalorder %v12, 16
  %v118 = vsel %vm117, %v114, %v116
  %v119 = vsel %vm117, %v112, %v114
  %v120 = vsel %vm117, %v110, %v112
  %v121 = vsel %vm117, %v116, %v110
  %v122 = vsel %vm32, %v121, 0.0
  %v123 = vsel %vm33, %v120, 0.0
  %v124 = vsel %vm34, %v119, 0.0
  %v125 = vsel %vm35, %v118, 0.0
  %126 = vst [vmem:[#allocation2 + $0x20] sm:$0xff] %v122
  %127 = vst [vmem:[#allocation2 + $0x28] sm:$0xff] %v123
  %128 = vst [vmem:[#allocation2 + $0x30] sm:$0xff] %v124
  %129 = vst [vmem:[#allocation2 + $0x38] sm:$0xff] %v125
  %130 = vrot.lane.b32.xlu0 %v84, 15
  %v131 = vpop.permute.xlu0 %130
  %132 = vrot.lane.b32.xlu0 %v85, 15
  %v133 = vpop.permute.xlu0 %132
  %134 = vrot.lane.b32.xlu0 %v86, 15
  %v135 = vpop.permute.xlu0 %134
  %136 = vrot.lane.b32.xlu0 %v87, 15
  %v137 = vpop.permute.xlu0 %136
  %vm138 = vcmp.lt.s32.totalorder %v12, 15
  %v139 = vsel %vm138, %v135, %v137
  %v140 = vsel %vm138, %v133, %v135
  %v141 = vsel %vm138, %v131, %v133
  %v142 = vsel %vm138, %v137, %v131
  %v143 = vsel %vm48, %v142, 0.0
  %v144 = vsel %vm49, %v141, 0.0
  %v145 = vsel %vm50, %v140, 0.0
  %v146 = vsel %vm51, %v139, 0.0
  %147 = vst [vmem:[#allocation2 + $0x40] sm:$0xff] %v143
  %148 = vst [vmem:[#allocation2 + $0x48] sm:$0xff] %v144
  %149 = vst [vmem:[#allocation2 + $0x50] sm:$0xff] %v145
  %150 = vst [vmem:[#allocation2 + $0x58] sm:$0xff] %v146
  %151 = vrot.lane.b32.xlu0 %v84, 1
  %v152 = vpop.permute.xlu0 %151
  %153 = vrot.lane.b32.xlu0 %v85, 1
  %v154 = vpop.permute.xlu0 %153
  %155 = vrot.lane.b32.xlu0 %v86, 1
  %v156 = vpop.permute.xlu0 %155
  %157 = vrot.lane.b32.xlu0 %v87, 1
  %v158 = vpop.permute.xlu0 %157
  %vm159 = vcmp.lt.s32.totalorder %v12, 1
  %v160 = vsel %vm159, %v156, %v158
  %v161 = vsel %vm159, %v154, %v156
  %v162 = vsel %vm159, %v152, %v154
  %v163 = vsel %vm159, %v158, %v152
  %v164 = vsel %vm52, %v163, 0.0
  %v165 = vsel %vm53, %v162, 0.0
  %v166 = vsel %vm54, %v161, 0.0
  %v167 = vsel %vm55, %v160, 0.0
  %168 = vst [vmem:[#allocation2 + $0x60] sm:$0xff] %v164
  %169 = vst [vmem:[#allocation2 + $0x68] sm:$0xff] %v165
  %170 = vst [vmem:[#allocation2 + $0x70] sm:$0xff] %v166
  %171 = vst [vmem:[#allocation2 + $0x78] sm:$0xff] %v167
  %v172 = vsel %vm24, %v84, 0.0
  %v173 = vsel %vm25, %v85, 0.0
  %v174 = vsel %vm26, %v86, 0.0
  %v175 = vsel %vm27, %v87, 0.0
  %176 = vst [vmem:[#allocation2 + $0x80] sm:$0xff] %v172
  %177 = vst [vmem:[#allocation2 + $0x88] sm:$0xff] %v173
  %178 = vst [vmem:[#allocation2 + $0x90] sm:$0xff] %v174
  %179 = vst [vmem:[#allocation2 + $0x98] sm:$0xff] %v175
  %180 = vrot.lane.b32.xlu0 %v84, 127
  %v181 = vpop.permute.xlu0 %180
  %182 = vrot.lane.b32.xlu0 %v85, 127
  %v183 = vpop.permute.xlu0 %182
  %184 = vrot.lane.b32.xlu0 %v86, 127
  %v185 = vpop.permute.xlu0 %184
  %186 = vrot.lane.b32.xlu0 %v87, 127
  %v187 = vpop.permute.xlu0 %186
  %vm188 = vcmp.lt.s32.totalorder %v12, 127
  %v189 = vsel %vm188, %v185, %v187
  %v190 = vsel %vm188, %v183, %v185
  %v191 = vsel %vm188, %v181, %v183
  %v192 = vsel %vm188, %v187, %v181
  %v193 = vsel %vm56, %v191, 0.0
  %v194 = vsel %vm57, %v190, 0.0
  %v195 = vsel %vm58, %v189, 0.0
  %v196 = vsel %vm59, %v192, 0.0
  %197 = vst [vmem:[#allocation2 + $0xa0] sm:$0xff] %v193
  %198 = vst [vmem:[#allocation2 + $0xa8] sm:$0xff] %v194
  %199 = vst [vmem:[#allocation2 + $0xb0] sm:$0xff] %v195
  %200 = vst [vmem:[#allocation2 + $0xb8] sm:$0xff] %v196
  %201 = vrot.lane.b32.xlu0 %v84, 113
  %v202 = vpop.permute.xlu0 %201
  %203 = vrot.lane.b32.xlu0 %v85, 113
  %v204 = vpop.permute.xlu0 %203
  %205 = vrot.lane.b32.xlu0 %v86, 113
  %v206 = vpop.permute.xlu0 %205
  %207 = vrot.lane.b32.xlu0 %v87, 113
  %v208 = vpop.permute.xlu0 %207
  %vm209 = vcmp.lt.s32.totalorder %v12, 113
  %v210 = vsel %vm209, %v206, %v208
  %v211 = vsel %vm209, %v204, %v206
  %v212 = vsel %vm209, %v202, %v204
  %v213 = vsel %vm209, %v208, %v202
  %v214 = vsel %vm68, %v212, 0.0
  %v215 = vsel %vm69, %v211, 0.0
  %v216 = vsel %vm70, %v210, 0.0
  %v217 = vsel %vm71, %v213, 0.0
  %218 = vst [vmem:[#allocation2 + $0xc0] sm:$0xff] %v214
  %219 = vst [vmem:[#allocation2 + $0xc8] sm:$0xff] %v215
  %220 = vst [vmem:[#allocation2 + $0xd0] sm:$0xff] %v216
  %221 = vst [vmem:[#allocation2 + $0xd8] sm:$0xff] %v217
  %222 = vrot.lane.b32.xlu0 %v84, 112
  %v223 = vpop.permute.xlu0 %222
  %224 = vrot.lane.b32.xlu0 %v85, 112
  %v225 = vpop.permute.xlu0 %224
  %226 = vrot.lane.b32.xlu0 %v86, 112
  %v227 = vpop.permute.xlu0 %226
  %228 = vrot.lane.b32.xlu0 %v87, 112
  %v229 = vpop.permute.xlu0 %228
  %vm230 = vcmp.lt.s32.totalorder %v12, 112
  %v231 = vsel %vm230, %v227, %v229
  %v232 = vsel %vm230, %v225, %v227
  %v233 = vsel %vm230, %v223, %v225
  %v234 = vsel %vm230, %v229, %v223
  %v235 = vsel %vm64, %v233, 0.0
  %v236 = vsel %vm65, %v232, 0.0
  %v237 = vsel %vm66, %v231, 0.0
  %v238 = vsel %vm67, %v234, 0.0
  %239 = vst [vmem:[#allocation2 + $0xe0] sm:$0xff] %v235
  %240 = vst [vmem:[#allocation2 + $0xe8] sm:$0xff] %v236
  %241 = vst [vmem:[#allocation2 + $0xf0] sm:$0xff] %v237
  %242 = vst [vmem:[#allocation2 + $0xf8] sm:$0xff] %v238
  %243 = vrot.lane.b32.xlu0 %v84, 111
  %v244 = vpop.permute.xlu0 %243
  %245 = vrot.lane.b32.xlu0 %v85, 111
  %v246 = vpop.permute.xlu0 %245
  %247 = vrot.lane.b32.xlu0 %v86, 111
  %v248 = vpop.permute.xlu0 %247
  %249 = vrot.lane.b32.xlu0 %v87, 111
  %v250 = vpop.permute.xlu0 %249
  %vm251 = vcmp.lt.s32.totalorder %v12, 111
  %v252 = vsel %vm251, %v248, %v250
  %v253 = vsel %vm251, %v246, %v248
  %v254 = vsel %vm251, %v244, %v246
  %v255 = vsel %vm251, %v250, %v244
  %v256 = vsel %vm72, %v254, 0.0
  %v257 = vsel %vm73, %v253, 0.0
  %v258 = vsel %vm74, %v252, 0.0
  %v259 = vsel %vm75, %v255, 0.0
  %260 = vst [vmem:[#allocation2 + $0x100] sm:$0xff] %v256
  %261 = vst [vmem:[#allocation2 + $0x108] sm:$0xff] %v257
  %262 = vst [vmem:[#allocation2 + $0x110] sm:$0xff] %v258
  %263 = vst [vmem:[#allocation2 + $0x118] sm:$0xff] %v259
  %v264 = vld [vmem:[%s1] sm:$0xff]
  %v265 = vld [vmem:[#allocation2] sm:$0xff]
  %v266 = vld [vmem:[#allocation2 + $0x8] sm:$0xff]
  %v267 = vld [vmem:[#allocation2 + $0x10] sm:$0xff]
  %v268 = vld [vmem:[#allocation2 + $0x18] sm:$0xff]
  %v269 = vld [vmem:[#allocation2 + $0x20] sm:$0xff]
  %v270 = vld [vmem:[#allocation2 + $0x28] sm:$0xff]
  %v271 = vld [vmem:[#allocation2 + $0x30] sm:$0xff]
  %v272 = vld [vmem:[#allocation2 + $0x38] sm:$0xff]
  %v273 = vld [vmem:[#allocation2 + $0x40] sm:$0xff]
  %v274 = vld [vmem:[#allocation2 + $0x48] sm:$0xff]
  %v275 = vld [vmem:[#allocation2 + $0x50] sm:$0xff]
  %v276 = vld [vmem:[#allocation2 + $0x58] sm:$0xff]
  %v277 = vld [vmem:[#allocation2 + $0x60] sm:$0xff]
  %v278 = vld [vmem:[#allocation2 + $0x68] sm:$0xff]
  %v279 = vld [vmem:[#allocation2 + $0x70] sm:$0xff]
  %v280 = vld [vmem:[#allocation2 + $0x78] sm:$0xff]
  %v281 = vld [vmem:[#allocation2 + $0x80] sm:$0xff]
  %v282 = vld [vmem:[#allocation2 + $0x88] sm:$0xff]
  %v283 = vld [vmem:[#allocation2 + $0x90] sm:$0xff]
  %v284 = vld [vmem:[#allocation2 + $0x98] sm:$0xff]
  %v285 = vld [vmem:[#allocation2 + $0xa0] sm:$0xff]
  %v286 = vld [vmem:[#allocation2 + $0xa8] sm:$0xff]
  %v287 = vld [vmem:[#allocation2 + $0xb0] sm:$0xff]
  %v288 = vld [vmem:[#allocation2 + $0xb8] sm:$0xff]
  %v289 = vld [vmem:[#allocation2 + $0xc0] sm:$0xff]
  %v290 = vld [vmem:[#allocation2 + $0xc8] sm:$0xff]
  %v291 = vld [vmem:[#allocation2 + $0xd0] sm:$0xff]
  %v292 = vld [vmem:[#allocation2 + $0xd8] sm:$0xff]
  %v293 = vld [vmem:[#allocation2 + $0xe0] sm:$0xff]
  %v294 = vld [vmem:[#allocation2 + $0xe8] sm:$0xff]
  %v295 = vld [vmem:[#allocation2 + $0xf0] sm:$0xff]
  %v296 = vld [vmem:[#allocation2 + $0xf8] sm:$0xff]
  %v297 = vld [vmem:[#allocation2 + $0x100] sm:$0xff]
  %v298 = vld [vmem:[#allocation2 + $0x108] sm:$0xff]
  %v299 = vld [vmem:[#allocation2 + $0x110] sm:$0xff]
  %v300 = vld [vmem:[#allocation2 + $0x118] sm:$0xff]
  %v301 = vld [vmem:[#allocation2 + $0x120] sm:$0xff]
  %v302 = vld [vmem:[#allocation2 + $0x128] sm:$0xff]
  %v303 = vld [vmem:[#allocation2 + $0x130] sm:$0xff]
  %v304 = vld [vmem:[#allocation2 + $0x138] sm:$0xff]
  %vm305 = vcmask 654336
  %v307 = vsel %vm305, %v264, 0
  %309 = vmatprep.subr.mxu0 %v266
  %310 = vmatpush1.msra.mxu0 %v265
  %311 = vmatprep.subr.mxu0 %v270
  %312 = vmatpush1.msra.mxu0 %v269
  %313 = vmatprep.subr.mxu0 %v274
  %314 = vmatpush1.msra.mxu0 %v273
  %315 = vmatprep.subr.mxu0 %v278
  %316 = vmatpush1.msra.mxu0 %v277
  %317 = vmatprep.subr.mxu0 %v282
  %318 = vmatpush1.msra.mxu0 %v281
  %319 = vmatprep.subr.mxu0 %v286
  %320 = vmatpush1.msra.mxu0 %v285
  %321 = vmatprep.subr.mxu0 %v290
  %322 = vmatpush1.msra.mxu0 %v289
  %323 = vmatprep.subr.mxu0 %v294
  %324 = vmatpush1.msra.mxu0 %v293
  %325 = vmatprep.subr.mxu0 %v298
  %326 = vmatpush1.msra.mxu0 %v297
  %327 = vmatprep.subr.mxu0 %v302
  %328 = vmatpush1.msra.mxu0 %v301
  %329 = vmatprep.subr.mxu0 0.0
  %330 = vmatpush1.msra.mxu0 0.0
  %331 = vmatprep.subr.mxu0 0.0
  %332 = vmatpush1.msra.mxu0 0.0
  %333 = vmatprep.subr.mxu0 0.0
  %334 = vmatpush1.msra.mxu0 0.0
  %335 = vmatprep.subr.mxu0 0.0
  %336 = vmatpush1.msra.mxu0 0.0
  %337 = vmatprep.subr.mxu0 0.0
  %338 = vmatpush1.msra.mxu0 0.0
  %339 = vmatprep.subr.mxu0 0.0
  %340 = vmatpush1.msra.mxu0 0.0
  %341 = vmatprep.subr.mxu0 0.0
  %342 = vmatpush1.msra.mxu0 0.0
  %343 = vmatprep.subr.mxu0 0.0
  %344 = vmatpush1.msra.mxu0 0.0
  %345 = vmatprep.subr.mxu0 0.0
  %346 = vmatpush1.msra.mxu0 0.0
  %347 = vmatprep.subr.mxu0 0.0
  %348 = vmatpush1.msra.mxu0 0.0
  %349 = vmatprep.subr.mxu0 0.0
  %350 = vmatpush1.msra.mxu0 0.0
  %351 = vmatprep.subr.mxu0 0.0
  %352 = vmatpush1.msra.mxu0 0.0
  %353 = vmatprep.subr.mxu0 0.0
  %354 = vmatpush1.msra.mxu0 0.0
  %355 = vmatprep.subr.mxu0 0.0
  %356 = vmatpush1.msra.mxu0 0.0
  %357 = vmatprep.subr.mxu0 0.0
  %358 = vmatpush1.msra.mxu0 0.0
  %359 = vmatprep.subr.mxu0 0.0
  %360 = vmatpush1.msra.mxu0 0.0
  %361 = vmatprep.subr.mxu0 0.0
  %362 = vmatpush1.msra.mxu0 0.0
  %363 = vmatprep.subr.mxu0 0.0
  %364 = vmatpush1.msra.mxu0 0.0
  %365 = vmatprep.subr.mxu0 0.0
  %366 = vmatpush1.msra.mxu0 0.0
  %367 = vmatprep.subr.mxu0 0.0
  %368 = vmatpush1.msra.mxu0 0.0
  %369 = vmatprep.subr.mxu0 0.0
  %370 = vmatpush1.msra.mxu0 0.0
  %371 = vmatprep.subr.mxu0 0.0
  %372 = vmatpush1.msra.mxu0 0.0
  %373 = vmatprep.mubr.f32.mxu0 0.0
  %374 = vmatmul.mubr.f32.gmra.mrb[0].mxu0 %v307
  %v375 = vpop.f32.mrb[0].mxu0
  %v376 = vadd.f32 0.0, %v375
  %v377 = vpop.f32.mrb[0].mxu0
  %v378 = vadd.f32 0.0, %v377
  %379 = vdwg.mxu0
  %380 = vmatprep.subr.mxu0 %v268
  %381 = vmatpush1.msra.mxu0 %v267
  %382 = vmatprep.subr.mxu0 %v272
  %383 = vmatpush1.msra.mxu0 %v271
  %384 = vmatprep.subr.mxu0 %v276
  %385 = vmatpush1.msra.mxu0 %v275
  %386 = vmatprep.subr.mxu0 %v280
  %387 = vmatpush1.msra.mxu0 %v279
  %388 = vmatprep.subr.mxu0 %v284
  %389 = vmatpush1.msra.mxu0 %v283
  %390 = vmatprep.subr.mxu0 %v288
  %391 = vmatpush1.msra.mxu0 %v287
  %392 = vmatprep.subr.mxu0 %v292
  %393 = vmatpush1.msra.mxu0 %v291
  %394 = vmatprep.subr.mxu0 %v296
  %395 = vmatpush1.msra.mxu0 %v295
  %396 = vmatprep.subr.mxu0 %v300
  %397 = vmatpush1.msra.mxu0 %v299
  %398 = vmatprep.subr.mxu0 %v304
  %399 = vmatpush1.msra.mxu0 %v303
  %400 = vmatprep.subr.mxu0 0.0
  %401 = vmatpush1.msra.mxu0 0.0
  %402 = vmatprep.subr.mxu0 0.0
  %403 = vmatpush1.msra.mxu0 0.0
  %404 = vmatprep.subr.mxu0 0.0
  %405 = vmatpush1.msra.mxu0 0.0
  %406 = vmatprep.subr.mxu0 0.0
  %407 = vmatpush1.msra.mxu0 0.0
  %408 = vmatprep.subr.mxu0 0.0
  %409 = vmatpush1.msra.mxu0 0.0
  %410 = vmatprep.subr.mxu0 0.0
  %411 = vmatpush1.msra.mxu0 0.0
  %412 = vmatprep.subr.mxu0 0.0
  %413 = vmatpush1.msra.mxu0 0.0
  %414 = vmatprep.subr.mxu0 0.0
  %415 = vmatpush1.msra.mxu0 0.0
  %416 = vmatprep.subr.mxu0 0.0
  %417 = vmatpush1.msra.mxu0 0.0
  %418 = vmatprep.subr.mxu0 0.0
  %419 = vmatpush1.msra.mxu0 0.0
  %420 = vmatprep.subr.mxu0 0.0
  %421 = vmatpush1.msra.mxu0 0.0
  %422 = vmatprep.subr.mxu0 0.0
  %423 = vmatpush1.msra.mxu0 0.0
  %424 = vmatprep.subr.mxu0 0.0
  %425 = vmatpush1.msra.mxu0 0.0
  %426 = vmatprep.subr.mxu0 0.0
  %427 = vmatpush1.msra.mxu0 0.0
  %428 = vmatprep.subr.mxu0 0.0
  %429 = vmatpush1.msra.mxu0 0.0
  %430 = vmatprep.subr.mxu0 0.0
  %431 = vmatpush1.msra.mxu0 0.0
  %432 = vmatprep.subr.mxu0 0.0
  %433 = vmatpush1.msra.mxu0 0.0
  %434 = vmatprep.subr.mxu0 0.0
  %435 = vmatpush1.msra.mxu0 0.0
  %436 = vmatprep.subr.mxu0 0.0
  %437 = vmatpush1.msra.mxu0 0.0
  %438 = vmatprep.subr.mxu0 0.0
  %439 = vmatpush1.msra.mxu0 0.0
  %440 = vmatprep.subr.mxu0 0.0
  %441 = vmatpush1.msra.mxu0 0.0
  %442 = vmatprep.subr.mxu0 0.0
  %443 = vmatpush1.msra.mxu0 0.0
  %444 = vmatprep.mubr.f32.mxu0 0.0
  %445 = vmatmul.mubr.f32.gmra.mrb[0].mxu0 %v307
  %v446 = vpop.f32.mrb[0].mxu0
  %v447 = vadd.f32 0.0, %v446
  %v448 = vpop.f32.mrb[0].mxu0
  %v449 = vadd.f32 0.0, %v448
  %450 = vdwg.mxu0
  %v451 = vmax.f32 %v376, 0.0
  %v452 = vmax.f32 %v378, 0.0
  %v453 = vmax.f32 %v447, 0.0
  %v454 = vmax.f32 %v449, 0.0
  %455 = vrot.lane.b32.xlu0 %v451, 17
  %v456 = vpop.permute.xlu0 %455
  %457 = vrot.lane.b32.xlu0 %v452, 17
  %v458 = vpop.permute.xlu0 %457
  %459 = vrot.lane.b32.xlu0 %v453, 17
  %v460 = vpop.permute.xlu0 %459
  %461 = vrot.lane.b32.xlu0 %v454, 17
  %v462 = vpop.permute.xlu0 %461
  %v463 = vsel %vm96, %v460, %v462
  %v464 = vsel %vm96, %v458, %v460
  %v465 = vsel %vm96, %v456, %v458
  %v466 = vsel %vm96, %v462, %v456
  %v467 = vsel %vm40, %v466, 0.0
  %v468 = vsel %vm41, %v465, 0.0
  %v469 = vsel %vm42, %v464, 0.0
  %v470 = vsel %vm43, %v463, 0.0
  %471 = vst [vmem:[#allocation2] sm:$0xff] %v467
  %472 = vst [vmem:[#allocation2 + $0x8] sm:$0xff] %v468
  %473 = vst [vmem:[#allocation2 + $0x10] sm:$0xff] %v469
  %474 = vst [vmem:[#allocation2 + $0x18] sm:$0xff] %v470
  %475 = vrot.lane.b32.xlu0 %v451, 16
  %v476 = vpop.permute.xlu0 %475
  %477 = vrot.lane.b32.xlu0 %v452, 16
  %v478 = vpop.permute.xlu0 %477
  %479 = vrot.lane.b32.xlu0 %v453, 16
  %v480 = vpop.permute.xlu0 %479
  %481 = vrot.lane.b32.xlu0 %v454, 16
  %v482 = vpop.permute.xlu0 %481
  %v483 = vsel %vm117, %v480, %v482
  %v484 = vsel %vm117, %v478, %v480
  %v485 = vsel %vm117, %v476, %v478
  %v486 = vsel %vm117, %v482, %v476
  %v487 = vsel %vm32, %v486, 0.0
  %v488 = vsel %vm33, %v485, 0.0
  %v489 = vsel %vm34, %v484, 0.0
  %v490 = vsel %vm35, %v483, 0.0
  %491 = vst [vmem:[#allocation2 + $0x20] sm:$0xff] %v487
  %492 = vst [vmem:[#allocation2 + $0x28] sm:$0xff] %v488
  %493 = vst [vmem:[#allocation2 + $0x30] sm:$0xff] %v489
  %494 = vst [vmem:[#allocation2 + $0x38] sm:$0xff] %v490
  %495 = vrot.lane.b32.xlu0 %v451, 15
  %v496 = vpop.permute.xlu0 %495
  %497 = vrot.lane.b32.xlu0 %v452, 15
  %v498 = vpop.permute.xlu0 %497
  %499 = vrot.lane.b32.xlu0 %v453, 15
  %v500 = vpop.permute.xlu0 %499
  %501 = vrot.lane.b32.xlu0 %v454, 15
  %v502 = vpop.permute.xlu0 %501
  %v503 = vsel %vm138, %v500, %v502
  %v504 = vsel %vm138, %v498, %v500
  %v505 = vsel %vm138, %v496, %v498
  %v506 = vsel %vm138, %v502, %v496
  %v507 = vsel %vm48, %v506, 0.0
  %v508 = vsel %vm49, %v505, 0.0
  %v509 = vsel %vm50, %v504, 0.0
  %v510 = vsel %vm51, %v503, 0.0
  %511 = vst [vmem:[#allocation2 + $0x40] sm:$0xff] %v507
  %512 = vst [vmem:[#allocation2 + $0x48] sm:$0xff] %v508
  %513 = vst [vmem:[#allocation2 + $0x50] sm:$0xff] %v509
  %514 = vst [vmem:[#allocation2 + $0x58] sm:$0xff] %v510
  %515 = vrot.lane.b32.xlu0 %v451, 1
  %v516 = vpop.permute.xlu0 %515
  %517 = vrot.lane.b32.xlu0 %v452, 1
  %v518 = vpop.permute.xlu0 %517
  %519 = vrot.lane.b32.xlu0 %v453, 1
  %v520 = vpop.permute.xlu0 %519
  %521 = vrot.lane.b32.xlu0 %v454, 1
  %v522 = vpop.permute.xlu0 %521
  %v523 = vsel %vm159, %v520, %v522
  %v524 = vsel %vm159, %v518, %v520
  %v525 = vsel %vm159, %v516, %v518
  %v526 = vsel %vm159, %v522, %v516
  %v527 = vsel %vm52, %v526, 0.0
  %v528 = vsel %vm53, %v525, 0.0
  %v529 = vsel %vm54, %v524, 0.0
  %v530 = vsel %vm55, %v523, 0.0
  %531 = vst [vmem:[#allocation2 + $0x60] sm:$0xff] %v527
  %532 = vst [vmem:[#allocation2 + $0x68] sm:$0xff] %v528
  %533 = vst [vmem:[#allocation2 + $0x70] sm:$0xff] %v529
  %534 = vst [vmem:[#allocation2 + $0x78] sm:$0xff] %v530
  %v535 = vsel %vm24, %v451, 0.0
  %v536 = vsel %vm25, %v452, 0.0
  %v537 = vsel %vm26, %v453, 0.0
  %v538 = vsel %vm27, %v454, 0.0
  %539 = vst [vmem:[#allocation2 + $0x80] sm:$0xff] %v535
  %540 = vst [vmem:[#allocation2 + $0x88] sm:$0xff] %v536
  %541 = vst [vmem:[#allocation2 + $0x90] sm:$0xff] %v537
  %542 = vst [vmem:[#allocation2 + $0x98] sm:$0xff] %v538
  %543 = vrot.lane.b32.xlu0 %v451, 127
  %v544 = vpop.permute.xlu0 %543
  %545 = vrot.lane.b32.xlu0 %v452, 127
  %v546 = vpop.permute.xlu0 %545
  %547 = vrot.lane.b32.xlu0 %v453, 127
  %v548 = vpop.permute.xlu0 %547
  %549 = vrot.lane.b32.xlu0 %v454, 127
  %v550 = vpop.permute.xlu0 %549
  %v551 = vsel %vm188, %v548, %v550
  %v552 = vsel %vm188, %v546, %v548
  %v553 = vsel %vm188, %v544, %v546
  %v554 = vsel %vm188, %v550, %v544
  %v555 = vsel %vm56, %v553, 0.0
  %v556 = vsel %vm57, %v552, 0.0
  %v557 = vsel %vm58, %v551, 0.0
  %v558 = vsel %vm59, %v554, 0.0
  %559 = vst [vmem:[#allocation2 + $0xa0] sm:$0xff] %v555
  %560 = vst [vmem:[#allocation2 + $0xa8] sm:$0xff] %v556
  %561 = vst [vmem:[#allocation2 + $0xb0] sm:$0xff] %v557
  %562 = vst [vmem:[#allocation2 + $0xb8] sm:$0xff] %v558
  %563 = vrot.lane.b32.xlu0 %v451, 113
  %v564 = vpop.permute.xlu0 %563
  %565 = vrot.lane.b32.xlu0 %v452, 113
  %v566 = vpop.permute.xlu0 %565
  %567 = vrot.lane.b32.xlu0 %v453, 113
  %v568 = vpop.permute.xlu0 %567
  %569 = vrot.lane.b32.xlu0 %v454, 113
  %v570 = vpop.permute.xlu0 %569
  %v571 = vsel %vm209, %v568, %v570
  %v572 = vsel %vm209, %v566, %v568
  %v573 = vsel %vm209, %v564, %v566
  %v574 = vsel %vm209, %v570, %v564
  %v575 = vsel %vm68, %v573, 0.0
  %v576 = vsel %vm69, %v572, 0.0
  %v577 = vsel %vm70, %v571, 0.0
  %v578 = vsel %vm71, %v574, 0.0
  %579 = vst [vmem:[#allocation2 + $0xc0] sm:$0xff] %v575
  %580 = vst [vmem:[#allocation2 + $0xc8] sm:$0xff] %v576
  %581 = vst [vmem:[#allocation2 + $0xd0] sm:$0xff] %v577
  %582 = vst [vmem:[#allocation2 + $0xd8] sm:$0xff] %v578
  %583 = vrot.lane.b32.xlu0 %v451, 112
  %v584 = vpop.permute.xlu0 %583
  %585 = vrot.lane.b32.xlu0 %v452, 112
  %v586 = vpop.permute.xlu0 %585
  %587 = vrot.lane.b32.xlu0 %v453, 112
  %v588 = vpop.permute.xlu0 %587
  %589 = vrot.lane.b32.xlu0 %v454, 112
  %v590 = vpop.permute.xlu0 %589
  %v591 = vsel %vm230, %v588, %v590
  %v592 = vsel %vm230, %v586, %v588
  %v593 = vsel %vm230, %v584, %v586
  %v594 = vsel %vm230, %v590, %v584
  %v595 = vsel %vm64, %v593, 0.0
  %v596 = vsel %vm65, %v592, 0.0
  %v597 = vsel %vm66, %v591, 0.0
  %v598 = vsel %vm67, %v594, 0.0
  %599 = vst [vmem:[#allocation2 + $0xe0] sm:$0xff] %v595
  %600 = vst [vmem:[#allocation2 + $0xe8] sm:$0xff] %v596
  %601 = vst [vmem:[#allocation2 + $0xf0] sm:$0xff] %v597
  %602 = vst [vmem:[#allocation2 + $0xf8] sm:$0xff] %v598
  %603 = vrot.lane.b32.xlu0 %v451, 111
  %v604 = vpop.permute.xlu0 %603
  %605 = vrot.lane.b32.xlu0 %v452, 111
  %v606 = vpop.permute.xlu0 %605
  %607 = vrot.lane.b32.xlu0 %v453, 111
  %v608 = vpop.permute.xlu0 %607
  %609 = vrot.lane.b32.xlu0 %v454, 111
  %v610 = vpop.permute.xlu0 %609
  %v611 = vsel %vm251, %v608, %v610
  %v612 = vsel %vm251, %v606, %v608
  %v613 = vsel %vm251, %v604, %v606
  %v614 = vsel %vm251, %v610, %v604
  %v615 = vsel %vm72, %v613, 0.0
  %v616 = vsel %vm73, %v612, 0.0
  %v617 = vsel %vm74, %v611, 0.0
  %v618 = vsel %vm75, %v614, 0.0
  %619 = vst [vmem:[#allocation2 + $0x100] sm:$0xff] %v615
  %620 = vst [vmem:[#allocation2 + $0x108] sm:$0xff] %v616
  %621 = vst [vmem:[#allocation2 + $0x110] sm:$0xff] %v617
  %622 = vst [vmem:[#allocation2 + $0x118] sm:$0xff] %v618
  %s623 = scalar_lea.vmem %s1, 8
  %v624 = vld [vmem:[%s623] sm:$0xff]
  %v625 = vld [vmem:[#allocation2] sm:$0xff]
  %v626 = vld [vmem:[#allocation2 + $0x8] sm:$0xff]
  %v627 = vld [vmem:[#allocation2 + $0x10] sm:$0xff]
  %v628 = vld [vmem:[#allocation2 + $0x18] sm:$0xff]
  %v629 = vld [vmem:[#allocation2 + $0x20] sm:$0xff]
  %v630 = vld [vmem:[#allocation2 + $0x28] sm:$0xff]
  %v631 = vld [vmem:[#allocation2 + $0x30] sm:$0xff]
  %v632 = vld [vmem:[#allocation2 + $0x38] sm:$0xff]
  %v633 = vld [vmem:[#allocation2 + $0x40] sm:$0xff]
  %v634 = vld [vmem:[#allocation2 + $0x48] sm:$0xff]
  %v635 = vld [vmem:[#allocation2 + $0x50] sm:$0xff]
  %v636 = vld [vmem:[#allocation2 + $0x58] sm:$0xff]
  %v637 = vld [vmem:[#allocation2 + $0x60] sm:$0xff]
  %v638 = vld [vmem:[#allocation2 + $0x68] sm:$0xff]
  %v639 = vld [vmem:[#allocation2 + $0x70] sm:$0xff]
  %v640 = vld [vmem:[#allocation2 + $0x78] sm:$0xff]
  %v641 = vld [vmem:[#allocation2 + $0x80] sm:$0xff]
  %v642 = vld [vmem:[#allocation2 + $0x88] sm:$0xff]
  %v643 = vld [vmem:[#allocation2 + $0x90] sm:$0xff]
  %v644 = vld [vmem:[#allocation2 + $0x98] sm:$0xff]
  %v645 = vld [vmem:[#allocation2 + $0xa0] sm:$0xff]
  %v646 = vld [vmem:[#allocation2 + $0xa8] sm:$0xff]
  %v647 = vld [vmem:[#allocation2 + $0xb0] sm:$0xff]
  %v648 = vld [vmem:[#allocation2 + $0xb8] sm:$0xff]
  %v649 = vld [vmem:[#allocation2 + $0xc0] sm:$0xff]
  %v650 = vld [vmem:[#allocation2 + $0xc8] sm:$0xff]
  %v651 = vld [vmem:[#allocation2 + $0xd0] sm:$0xff]
  %v652 = vld [vmem:[#allocation2 + $0xd8] sm:$0xff]
  %v653 = vld [vmem:[#allocation2 + $0xe0] sm:$0xff]
  %v654 = vld [vmem:[#allocation2 + $0xe8] sm:$0xff]
  %v655 = vld [vmem:[#allocation2 + $0xf0] sm:$0xff]
  %v656 = vld [vmem:[#allocation2 + $0xf8] sm:$0xff]
  %v657 = vld [vmem:[#allocation2 + $0x100] sm:$0xff]
  %v658 = vld [vmem:[#allocation2 + $0x108] sm:$0xff]
  %v659 = vld [vmem:[#allocation2 + $0x110] sm:$0xff]
  %v660 = vld [vmem:[#allocation2 + $0x118] sm:$0xff]
  %v661 = vld [vmem:[#allocation2 + $0x120] sm:$0xff]
  %v662 = vld [vmem:[#allocation2 + $0x128] sm:$0xff]
  %v663 = vld [vmem:[#allocation2 + $0x130] sm:$0xff]
  %v664 = vld [vmem:[#allocation2 + $0x138] sm:$0xff]
  %v666 = vsel %vm305, %v624, 0
  %668 = vmatprep.subr.mxu0 %v626
  %669 = vmatpush1.msra.mxu0 %v625
  %670 = vmatprep.subr.mxu0 %v630
  %671 = vmatpush1.msra.mxu0 %v629
  %672 = vmatprep.subr.mxu0 %v634
  %673 = vmatpush1.msra.mxu0 %v633
  %674 = vmatprep.subr.mxu0 %v638
  %675 = vmatpush1.msra.mxu0 %v637
  %676 = vmatprep.subr.mxu0 %v642
  %677 = vmatpush1.msra.mxu0 %v641
  %678 = vmatprep.subr.mxu0 %v646
  %679 = vmatpush1.msra.mxu0 %v645
  %680 = vmatprep.subr.mxu0 %v650
  %681 = vmatpush1.msra.mxu0 %v649
  %682 = vmatprep.subr.mxu0 %v654
  %683 = vmatpush1.msra.mxu0 %v653
  %684 = vmatprep.subr.mxu0 %v658
  %685 = vmatpush1.msra.mxu0 %v657
  %686 = vmatprep.subr.mxu0 %v662
  %687 = vmatpush1.msra.mxu0 %v661
  %688 = vmatprep.subr.mxu0 0.0
  %689 = vmatpush1.msra.mxu0 0.0
  %690 = vmatprep.subr.mxu0 0.0
  %691 = vmatpush1.msra.mxu0 0.0
  %692 = vmatprep.subr.mxu0 0.0
  %693 = vmatpush1.msra.mxu0 0.0
  %694 = vmatprep.subr.mxu0 0.0
  %695 = vmatpush1.msra.mxu0 0.0
  %696 = vmatprep.subr.mxu0 0.0
  %697 = vmatpush1.msra.mxu0 0.0
  %698 = vmatprep.subr.mxu0 0.0
  %699 = vmatpush1.msra.mxu0 0.0
  %700 = vmatprep.subr.mxu0 0.0
  %701 = vmatpush1.msra.mxu0 0.0
  %702 = vmatprep.subr.mxu0 0.0
  %703 = vmatpush1.msra.mxu0 0.0
  %704 = vmatprep.subr.mxu0 0.0
  %705 = vmatpush1.msra.mxu0 0.0
  %706 = vmatprep.subr.mxu0 0.0
  %707 = vmatpush1.msra.mxu0 0.0
  %708 = vmatprep.subr.mxu0 0.0
  %709 = vmatpush1.msra.mxu0 0.0
  %710 = vmatprep.subr.mxu0 0.0
  %711 = vmatpush1.msra.mxu0 0.0
  %712 = vmatprep.subr.mxu0 0.0
  %713 = vmatpush1.msra.mxu0 0.0
  %714 = vmatprep.subr.mxu0 0.0
  %715 = vmatpush1.msra.mxu0 0.0
  %716 = vmatprep.subr.mxu0 0.0
  %717 = vmatpush1.msra.mxu0 0.0
  %718 = vmatprep.subr.mxu0 0.0
  %719 = vmatpush1.msra.mxu0 0.0
  %720 = vmatprep.subr.mxu0 0.0
  %721 = vmatpush1.msra.mxu0 0.0
  %722 = vmatprep.subr.mxu0 0.0
  %723 = vmatpush1.msra.mxu0 0.0
  %724 = vmatprep.subr.mxu0 0.0
  %725 = vmatpush1.msra.mxu0 0.0
  %726 = vmatprep.subr.mxu0 0.0
  %727 = vmatpush1.msra.mxu0 0.0
  %728 = vmatprep.subr.mxu0 0.0
  %729 = vmatpush1.msra.mxu0 0.0
  %730 = vmatprep.subr.mxu0 0.0
  %731 = vmatpush1.msra.mxu0 0.0
  %732 = vmatprep.mubr.f32.mxu0 0.0
  %733 = vmatmul.mubr.f32.gmra.mrb[0].mxu0 %v666
  %v734 = vpop.f32.mrb[0].mxu0
  %v735 = vadd.f32 0.0, %v734
  %v736 = vpop.f32.mrb[0].mxu0
  %v737 = vadd.f32 0.0, %v736
  %738 = vdwg.mxu0
  %739 = vmatprep.subr.mxu0 %v628
  %740 = vmatpush1.msra.mxu0 %v627
  %741 = vmatprep.subr.mxu0 %v632
  %742 = vmatpush1.msra.mxu0 %v631
  %743 = vmatprep.subr.mxu0 %v636
  %744 = vmatpush1.msra.mxu0 %v635
  %745 = vmatprep.subr.mxu0 %v640
  %746 = vmatpush1.msra.mxu0 %v639
  %747 = vmatprep.subr.mxu0 %v644
  %748 = vmatpush1.msra.mxu0 %v643
  %749 = vmatprep.subr.mxu0 %v648
  %750 = vmatpush1.msra.mxu0 %v647
  %751 = vmatprep.subr.mxu0 %v652
  %752 = vmatpush1.msra.mxu0 %v651
  %753 = vmatprep.subr.mxu0 %v656
  %754 = vmatpush1.msra.mxu0 %v655
  %755 = vmatprep.subr.mxu0 %v660
  %756 = vmatpush1.msra.mxu0 %v659
  %757 = vmatprep.subr.mxu0 %v664
  %758 = vmatpush1.msra.mxu0 %v663
  %759 = vmatprep.subr.mxu0 0.0
  %760 = vmatpush1.msra.mxu0 0.0
  %761 = vmatprep.subr.mxu0 0.0
  %762 = vmatpush1.msra.mxu0 0.0
  %763 = vmatprep.subr.mxu0 0.0
  %764 = vmatpush1.msra.mxu0 0.0
  %765 = vmatprep.subr.mxu0 0.0
  %766 = vmatpush1.msra.mxu0 0.0
  %767 = vmatprep.subr.mxu0 0.0
  %768 = vmatpush1.msra.mxu0 0.0
  %769 = vmatprep.subr.mxu0 0.0
  %770 = vmatpush1.msra.mxu0 0.0
  %771 = vmatprep.subr.mxu0 0.0
  %772 = vmatpush1.msra.mxu0 0.0
  %773 = vmatprep.subr.mxu0 0.0
  %774 = vmatpush1.msra.mxu0 0.0
  %775 = vmatprep.subr.mxu0 0.0
  %776 = vmatpush1.msra.mxu0 0.0
  %777 = vmatprep.subr.mxu0 0.0
  %778 = vmatpush1.msra.mxu0 0.0
  %779 = vmatprep.subr.mxu0 0.0
  %780 = vmatpush1.msra.mxu0 0.0
  %781 = vmatprep.subr.mxu0 0.0
  %782 = vmatpush1.msra.mxu0 0.0
  %783 = vmatprep.subr.mxu0 0.0
  %784 = vmatpush1.msra.mxu0 0.0
  %785 = vmatprep.subr.mxu0 0.0
  %786 = vmatpush1.msra.mxu0 0.0
  %787 = vmatprep.subr.mxu0 0.0
  %788 = vmatpush1.msra.mxu0 0.0
  %789 = vmatprep.subr.mxu0 0.0
  %790 = vmatpush1.msra.mxu0 0.0
  %791 = vmatprep.subr.mxu0 0.0
  %792 = vmatpush1.msra.mxu0 0.0
  %793 = vmatprep.subr.mxu0 0.0
  %794 = vmatpush1.msra.mxu0 0.0
  %795 = vmatprep.subr.mxu0 0.0
  %796 = vmatpush1.msra.mxu0 0.0
  %797 = vmatprep.subr.mxu0 0.0
  %798 = vmatpush1.msra.mxu0 0.0
  %799 = vmatprep.subr.mxu0 0.0
  %800 = vmatpush1.msra.mxu0 0.0
  %801 = vmatprep.subr.mxu0 0.0
  %802 = vmatpush1.msra.mxu0 0.0
  %803 = vmatprep.mubr.f32.mxu0 0.0
  %804 = vmatmul.mubr.f32.gmra.mrb[0].mxu0 %v666
  %v805 = vpop.f32.mrb[0].mxu0
  %v806 = vadd.f32 0.0, %v805
  %v807 = vpop.f32.mrb[0].mxu0
  %v808 = vadd.f32 0.0, %v807
  %809 = vdwg.mxu0
  %v810 = vmax.f32 %v735, 0.0
  %v811 = vmax.f32 %v737, 0.0
  %v812 = vmax.f32 %v806, 0.0
  %v813 = vmax.f32 %v808, 0.0
  %814 = vrot.lane.b32.xlu0 %v810, 17
  %v815 = vpop.permute.xlu0 %814
  %816 = vrot.lane.b32.xlu0 %v811, 17
  %v817 = vpop.permute.xlu0 %816
  %818 = vrot.lane.b32.xlu0 %v812, 17
  %v819 = vpop.permute.xlu0 %818
  %820 = vrot.lane.b32.xlu0 %v813, 17
  %v821 = vpop.permute.xlu0 %820
  %v822 = vsel %vm96, %v819, %v821
  %v823 = vsel %vm96, %v817, %v819
  %v824 = vsel %vm96, %v815, %v817
  %v825 = vsel %vm96, %v821, %v815
  %v826 = vsel %vm40, %v825, 0.0
  %v827 = vsel %vm41, %v824, 0.0
  %v828 = vsel %vm42, %v823, 0.0
  %v829 = vsel %vm43, %v822, 0.0
  %830 = vst [vmem:[#allocation2] sm:$0xff] %v826
  %831 = vst [vmem:[#allocation2 + $0x8] sm:$0xff] %v827
  %832 = vst [vmem:[#allocation2 + $0x10] sm:$0xff] %v828
  %833 = vst [vmem:[#allocation2 + $0x18] sm:$0xff] %v829
  %834 = vrot.lane.b32.xlu0 %v810, 16
  %v835 = vpop.permute.xlu0 %834
  %836 = vrot.lane.b32.xlu0 %v811, 16
  %v837 = vpop.permute.xlu0 %836
  %838 = vrot.lane.b32.xlu0 %v812, 16
  %v839 = vpop.permute.xlu0 %838
  %840 = vrot.lane.b32.xlu0 %v813, 16
  %v841 = vpop.permute.xlu0 %840
  %v842 = vsel %vm117, %v839, %v841
  %v843 = vsel %vm117, %v837, %v839
  %v844 = vsel %vm117, %v835, %v837
  %v845 = vsel %vm117, %v841, %v835
  %v846 = vsel %vm32, %v845, 0.0
  %v847 = vsel %vm33, %v844, 0.0
  %v848 = vsel %vm34, %v843, 0.0
  %v849 = vsel %vm35, %v842, 0.0
  %850 = vst [vmem:[#allocation2 + $0x20] sm:$0xff] %v846
  %851 = vst [vmem:[#allocation2 + $0x28] sm:$0xff] %v847
  %852 = vst [vmem:[#allocation2 + $0x30] sm:$0xff] %v848
  %853 = vst [vmem:[#allocation2 + $0x38] sm:$0xff] %v849
  %854 = vrot.lane.b32.xlu0 %v810, 15
  %v855 = vpop.permute.xlu0 %854
  %856 = vrot.lane.b32.xlu0 %v811, 15
  %v857 = vpop.permute.xlu0 %856
  %858 = vrot.lane.b32.xlu0 %v812, 15
  %v859 = vpop.permute.xlu0 %858
  %860 = vrot.lane.b32.xlu0 %v813, 15
  %v861 = vpop.permute.xlu0 %860
  %v862 = vsel %vm138, %v859, %v861
  %v863 = vsel %vm138, %v857, %v859
  %v864 = vsel %vm138, %v855, %v857
  %v865 = vsel %vm138, %v861, %v855
  %v866 = vsel %vm48, %v865, 0.0
  %v867 = vsel %vm49, %v864, 0.0
  %v868 = vsel %vm50, %v863, 0.0
  %v869 = vsel %vm51, %v862, 0.0
  %870 = vst [vmem:[#allocation2 + $0x40] sm:$0xff] %v866
  %871 = vst [vmem:[#allocation2 + $0x48] sm:$0xff] %v867
  %872 = vst [vmem:[#allocation2 + $0x50] sm:$0xff] %v868
  %873 = vst [vmem:[#allocation2 + $0x58] sm:$0xff] %v869
  %874 = vrot.lane.b32.xlu0 %v810, 1
  %v875 = vpop.permute.xlu0 %874
  %876 = vrot.lane.b32.xlu0 %v811, 1
  %v877 = vpop.permute.xlu0 %876
  %878 = vrot.lane.b32.xlu0 %v812, 1
  %v879 = vpop.permute.xlu0 %878
  %880 = vrot.lane.b32.xlu0 %v813, 1
  %v881 = vpop.permute.xlu0 %880
  %v882 = vsel %vm159, %v879, %v881
  %v883 = vsel %vm159, %v877, %v879
  %v884 = vsel %vm159, %v875, %v877
  %v885 = vsel %vm159, %v881, %v875
  %v886 = vsel %vm52, %v885, 0.0
  %v887 = vsel %vm53, %v884, 0.0
  %v888 = vsel %vm54, %v883, 0.0
  %v889 = vsel %vm55, %v882, 0.0
  %890 = vst [vmem:[#allocation2 + $0x60] sm:$0xff] %v886
  %891 = vst [vmem:[#allocation2 + $0x68] sm:$0xff] %v887
  %892 = vst [vmem:[#allocation2 + $0x70] sm:$0xff] %v888
  %893 = vst [vmem:[#allocation2 + $0x78] sm:$0xff] %v889
  %v894 = vsel %vm24, %v810, 0.0
  %v895 = vsel %vm25, %v811, 0.0
  %v896 = vsel %vm26, %v812, 0.0
  %v897 = vsel %vm27, %v813, 0.0
  %898 = vst [vmem:[#allocation2 + $0x80] sm:$0xff] %v894
  %899 = vst [vmem:[#allocation2 + $0x88] sm:$0xff] %v895
  %900 = vst [vmem:[#allocation2 + $0x90] sm:$0xff] %v896
  %901 = vst [vmem:[#allocation2 + $0x98] sm:$0xff] %v897
  %902 = vrot.lane.b32.xlu0 %v810, 127
  %v903 = vpop.permute.xlu0 %902
  %904 = vrot.lane.b32.xlu0 %v811, 127
  %v905 = vpop.permute.xlu0 %904
  %906 = vrot.lane.b32.xlu0 %v812, 127
  %v907 = vpop.permute.xlu0 %906
  %908 = vrot.lane.b32.xlu0 %v813, 127
  %v909 = vpop.permute.xlu0 %908
  %v910 = vsel %vm188, %v907, %v909
  %v911 = vsel %vm188, %v905, %v907
  %v912 = vsel %vm188, %v903, %v905
  %v913 = vsel %vm188, %v909, %v903
  %v914 = vsel %vm56, %v912, 0.0
  %v915 = vsel %vm57, %v911, 0.0
  %v916 = vsel %vm58, %v910, 0.0
  %v917 = vsel %vm59, %v913, 0.0
  %918 = vst [vmem:[#allocation2 + $0xa0] sm:$0xff] %v914
  %919 = vst [vmem:[#allocation2 + $0xa8] sm:$0xff] %v915
  %920 = vst [vmem:[#allocation2 + $0xb0] sm:$0xff] %v916
  %921 = vst [vmem:[#allocation2 + $0xb8] sm:$0xff] %v917
  %922 = vrot.lane.b32.xlu0 %v810, 113
  %v923 = vpop.permute.xlu0 %922
  %924 = vrot.lane.b32.xlu0 %v811, 113
  %v925 = vpop.permute.xlu0 %924
  %926 = vrot.lane.b32.xlu0 %v812, 113
  %v927 = vpop.permute.xlu0 %926
  %928 = vrot.lane.b32.xlu0 %v813, 113
  %v929 = vpop.permute.xlu0 %928
  %v930 = vsel %vm209, %v927, %v929
  %v931 = vsel %vm209, %v925, %v927
  %v932 = vsel %vm209, %v923, %v925
  %v933 = vsel %vm209, %v929, %v923
  %v934 = vsel %vm68, %v932, 0.0
  %v935 = vsel %vm69, %v931, 0.0
  %v936 = vsel %vm70, %v930, 0.0
  %v937 = vsel %vm71, %v933, 0.0
  %938 = vst [vmem:[#allocation2 + $0xc0] sm:$0xff] %v934
  %939 = vst [vmem:[#allocation2 + $0xc8] sm:$0xff] %v935
  %940 = vst [vmem:[#allocation2 + $0xd0] sm:$0xff] %v936
  %941 = vst [vmem:[#allocation2 + $0xd8] sm:$0xff] %v937
  %942 = vrot.lane.b32.xlu0 %v810, 112
  %v943 = vpop.permute.xlu0 %942
  %944 = vrot.lane.b32.xlu0 %v811, 112
  %v945 = vpop.permute.xlu0 %944
  %946 = vrot.lane.b32.xlu0 %v812, 112
  %v947 = vpop.permute.xlu0 %946
  %948 = vrot.lane.b32.xlu0 %v813, 112
  %v949 = vpop.permute.xlu0 %948
  %v950 = vsel %vm230, %v947, %v949
  %v951 = vsel %vm230, %v945, %v947
  %v952 = vsel %vm230, %v943, %v945
  %v953 = vsel %vm230, %v949, %v943
  %v954 = vsel %vm64, %v952, 0.0
  %v955 = vsel %vm65, %v951, 0.0
  %v956 = vsel %vm66, %v950, 0.0
  %v957 = vsel %vm67, %v953, 0.0
  %958 = vst [vmem:[#allocation2 + $0xe0] sm:$0xff] %v954
  %959 = vst [vmem:[#allocation2 + $0xe8] sm:$0xff] %v955
  %960 = vst [vmem:[#allocation2 + $0xf0] sm:$0xff] %v956
  %961 = vst [vmem:[#allocation2 + $0xf8] sm:$0xff] %v957
  %962 = vrot.lane.b32.xlu0 %v810, 111
  %v963 = vpop.permute.xlu0 %962
  %964 = vrot.lane.b32.xlu0 %v811, 111
  %v965 = vpop.permute.xlu0 %964
  %966 = vrot.lane.b32.xlu0 %v812, 111
  %v967 = vpop.permute.xlu0 %966
  %968 = vrot.lane.b32.xlu0 %v813, 111
  %v969 = vpop.permute.xlu0 %968
  %v970 = vsel %vm251, %v967, %v969
  %v971 = vsel %vm251, %v965, %v967
  %v972 = vsel %vm251, %v963, %v965
  %v973 = vsel %vm251, %v969, %v963
  %v974 = vsel %vm72, %v972, 0.0
  %v975 = vsel %vm73, %v971, 0.0
  %v976 = vsel %vm74, %v970, 0.0
  %v977 = vsel %vm75, %v973, 0.0
  %978 = vst [vmem:[#allocation2 + $0x100] sm:$0xff] %v974
  %979 = vst [vmem:[#allocation2 + $0x108] sm:$0xff] %v975
  %980 = vst [vmem:[#allocation2 + $0x110] sm:$0xff] %v976
  %981 = vst [vmem:[#allocation2 + $0x118] sm:$0xff] %v977
  %s982 = scalar_lea.vmem %s1, 16
  %v983 = vld [vmem:[%s982] sm:$0xff]
  %v984 = vld [vmem:[#allocation2] sm:$0xff]
  %v985 = vld [vmem:[#allocation2 + $0x8] sm:$0xff]
  %v986 = vld [vmem:[#allocation2 + $0x10] sm:$0xff]
  %v987 = vld [vmem:[#allocation2 + $0x18] sm:$0xff]
  %v988 = vld [vmem:[#allocation2 + $0x20] sm:$0xff]
  %v989 = vld [vmem:[#allocation2 + $0x28] sm:$0xff]
  %v990 = vld [vmem:[#allocation2 + $0x30] sm:$0xff]
  %v991 = vld [vmem:[#allocation2 + $0x38] sm:$0xff]
  %v992 = vld [vmem:[#allocation2 + $0x40] sm:$0xff]
  %v993 = vld [vmem:[#allocation2 + $0x48] sm:$0xff]
  %v994 = vld [vmem:[#allocation2 + $0x50] sm:$0xff]
  %v995 = vld [vmem:[#allocation2 + $0x58] sm:$0xff]
  %v996 = vld [vmem:[#allocation2 + $0x60] sm:$0xff]
  %v997 = vld [vmem:[#allocation2 + $0x68] sm:$0xff]
  %v998 = vld [vmem:[#allocation2 + $0x70] sm:$0xff]
  %v999 = vld [vmem:[#allocation2 + $0x78] sm:$0xff]
  %v1000 = vld [vmem:[#allocation2 + $0x80] sm:$0xff]
  %v1001 = vld [vmem:[#allocation2 + $0x88] sm:$0xff]
  %v1002 = vld [vmem:[#allocation2 + $0x90] sm:$0xff]
  %v1003 = vld [vmem:[#allocation2 + $0x98] sm:$0xff]
  %v1004 = vld [vmem:[#allocation2 + $0xa0] sm:$0xff]
  %v1005 = vld [vmem:[#allocation2 + $0xa8] sm:$0xff]
  %v1006 = vld [vmem:[#allocation2 + $0xb0] sm:$0xff]
  %v1007 = vld [vmem:[#allocation2 + $0xb8] sm:$0xff]
  %v1008 = vld [vmem:[#allocation2 + $0xc0] sm:$0xff]
  %v1009 = vld [vmem:[#allocation2 + $0xc8] sm:$0xff]
  %v1010 = vld [vmem:[#allocation2 + $0xd0] sm:$0xff]
  %v1011 = vld [vmem:[#allocation2 + $0xd8] sm:$0xff]
  %v1012 = vld [vmem:[#allocation2 + $0xe0] sm:$0xff]
  %v1013 = vld [vmem:[#allocation2 + $0xe8] sm:$0xff]
  %v1014 = vld [vmem:[#allocation2 + $0xf0] sm:$0xff]
  %v1015 = vld [vmem:[#allocation2 + $0xf8] sm:$0xff]
  %v1016 = vld [vmem:[#allocation2 + $0x100] sm:$0xff]
  %v1017 = vld [vmem:[#allocation2 + $0x108] sm:$0xff]
  %v1018 = vld [vmem:[#allocation2 + $0x110] sm:$0xff]
  %v1019 = vld [vmem:[#allocation2 + $0x118] sm:$0xff]
  %v1020 = vld [vmem:[#allocation2 + $0x120] sm:$0xff]
  %v1021 = vld [vmem:[#allocation2 + $0x128] sm:$0xff]
  %v1022 = vld [vmem:[#allocation2 + $0x130] sm:$0xff]
  %v1023 = vld [vmem:[#allocation2 + $0x138] sm:$0xff]
  %v1025 = vsel %vm305, %v983, 0
  %1027 = vmatprep.subr.mxu0 %v985
  %1028 = vmatpush1.msra.mxu0 %v984
  %1029 = vmatprep.subr.mxu0 %v989
  %1030 = vmatpush1.msra.mxu0 %v988
  %1031 = vmatprep.subr.mxu0 %v993
  %1032 = vmatpush1.msra.mxu0 %v992
  %1033 = vmatprep.subr.mxu0 %v997
  %1034 = vmatpush1.msra.mxu0 %v996
  %1035 = vmatprep.subr.mxu0 %v1001
  %1036 = vmatpush1.msra.mxu0 %v1000
  %1037 = vmatprep.subr.mxu0 %v1005
  %1038 = vmatpush1.msra.mxu0 %v1004
  %1039 = vmatprep.subr.mxu0 %v1009
  %1040 = vmatpush1.msra.mxu0 %v1008
  %1041 = vmatprep.subr.mxu0 %v1013
  %1042 = vmatpush1.msra.mxu0 %v1012
  %1043 = vmatprep.subr.mxu0 %v1017
  %1044 = vmatpush1.msra.mxu0 %v1016
  %1045 = vmatprep.subr.mxu0 %v1021
  %1046 = vmatpush1.msra.mxu0 %v1020
  %1047 = vmatprep.subr.mxu0 0.0
  %1048 = vmatpush1.msra.mxu0 0.0
  %1049 = vmatprep.subr.mxu0 0.0
  %1050 = vmatpush1.msra.mxu0 0.0
  %1051 = vmatprep.subr.mxu0 0.0
  %1052 = vmatpush1.msra.mxu0 0.0
  %1053 = vmatprep.subr.mxu0 0.0
  %1054 = vmatpush1.msra.mxu0 0.0
  %1055 = vmatprep.subr.mxu0 0.0
  %1056 = vmatpush1.msra.mxu0 0.0
  %1057 = vmatprep.subr.mxu0 0.0
  %1058 = vmatpush1.msra.mxu0 0.0
  %1059 = vmatprep.subr.mxu0 0.0
  %1060 = vmatpush1.msra.mxu0 0.0
  %1061 = vmatprep.subr.mxu0 0.0
  %1062 = vmatpush1.msra.mxu0 0.0
  %1063 = vmatprep.subr.mxu0 0.0
  %1064 = vmatpush1.msra.mxu0 0.0
  %1065 = vmatprep.subr.mxu0 0.0
  %1066 = vmatpush1.msra.mxu0 0.0
  %1067 = vmatprep.subr.mxu0 0.0
  %1068 = vmatpush1.msra.mxu0 0.0
  %1069 = vmatprep.subr.mxu0 0.0
  %1070 = vmatpush1.msra.mxu0 0.0
  %1071 = vmatprep.subr.mxu0 0.0
  %1072 = vmatpush1.msra.mxu0 0.0
  %1073 = vmatprep.subr.mxu0 0.0
  %1074 = vmatpush1.msra.mxu0 0.0
  %1075 = vmatprep.subr.mxu0 0.0
  %1076 = vmatpush1.msra.mxu0 0.0
  %1077 = vmatprep.subr.mxu0 0.0
  %1078 = vmatpush1.msra.mxu0 0.0
  %1079 = vmatprep.subr.mxu0 0.0
  %1080 = vmatpush1.msra.mxu0 0.0
  %1081 = vmatprep.subr.mxu0 0.0
  %1082 = vmatpush1.msra.mxu0 0.0
  %1083 = vmatprep.subr.mxu0 0.0
  %1084 = vmatpush1.msra.mxu0 0.0
  %1085 = vmatprep.subr.mxu0 0.0
  %1086 = vmatpush1.msra.mxu0 0.0
  %1087 = vmatprep.subr.mxu0 0.0
  %1088 = vmatpush1.msra.mxu0 0.0
  %1089 = vmatprep.subr.mxu0 0.0
  %1090 = vmatpush1.msra.mxu0 0.0
  %1091 = vmatprep.mubr.f32.mxu0 0.0
  %1092 = vmatmul.mubr.f32.gmra.mrb[0].mxu0 %v1025
  %v1093 = vpop.f32.mrb[0].mxu0
  %v1094 = vadd.f32 0.0, %v1093
  %v1095 = vpop.f32.mrb[0].mxu0
  %v1096 = vadd.f32 0.0, %v1095
  %1097 = vdwg.mxu0
  %1098 = vmatprep.subr.mxu0 %v987
  %1099 = vmatpush1.msra.mxu0 %v986
  %1100 = vmatprep.subr.mxu0 %v991
  %1101 = vmatpush1.msra.mxu0 %v990
  %1102 = vmatprep.subr.mxu0 %v995
  %1103 = vmatpush1.msra.mxu0 %v994
  %1104 = vmatprep.subr.mxu0 %v999
  %1105 = vmatpush1.msra.mxu0 %v998
  %1106 = vmatprep.subr.mxu0 %v1003
  %1107 = vmatpush1.msra.mxu0 %v1002
  %1108 = vmatprep.subr.mxu0 %v1007
  %1109 = vmatpush1.msra.mxu0 %v1006
  %1110 = vmatprep.subr.mxu0 %v1011
  %1111 = vmatpush1.msra.mxu0 %v1010
  %1112 = vmatprep.subr.mxu0 %v1015
  %1113 = vmatpush1.msra.mxu0 %v1014
  %1114 = vmatprep.subr.mxu0 %v1019
  %1115 = vmatpush1.msra.mxu0 %v1018
  %1116 = vmatprep.subr.mxu0 %v1023
  %1117 = vmatpush1.msra.mxu0 %v1022
  %1118 = vmatprep.subr.mxu0 0.0
  %1119 = vmatpush1.msra.mxu0 0.0
  %1120 = vmatprep.subr.mxu0 0.0
  %1121 = vmatpush1.msra.mxu0 0.0
  %1122 = vmatprep.subr.mxu0 0.0
  %1123 = vmatpush1.msra.mxu0 0.0
  %1124 = vmatprep.subr.mxu0 0.0
  %1125 = vmatpush1.msra.mxu0 0.0
  %1126 = vmatprep.subr.mxu0 0.0
  %1127 = vmatpush1.msra.mxu0 0.0
  %1128 = vmatprep.subr.mxu0 0.0
  %1129 = vmatpush1.msra.mxu0 0.0
  %1130 = vmatprep.subr.mxu0 0.0
  %1131 = vmatpush1.msra.mxu0 0.0
  %1132 = vmatprep.subr.mxu0 0.0
  %1133 = vmatpush1.msra.mxu0 0.0
  %1134 = vmatprep.subr.mxu0 0.0
  %1135 = vmatpush1.msra.mxu0 0.0
  %1136 = vmatprep.subr.mxu0 0.0
  %1137 = vmatpush1.msra.mxu0 0.0
  %1138 = vmatprep.subr.mxu0 0.0
  %1139 = vmatpush1.msra.mxu0 0.0
  %1140 = vmatprep.subr.mxu0 0.0
  %1141 = vmatpush1.msra.mxu0 0.0
  %1142 = vmatprep.subr.mxu0 0.0
  %1143 = vmatpush1.msra.mxu0 0.0
  %1144 = vmatprep.subr.mxu0 0.0
  %1145 = vmatpush1.msra.mxu0 0.0
  %1146 = vmatprep.subr.mxu0 0.0
  %1147 = vmatpush1.msra.mxu0 0.0
  %1148 = vmatprep.subr.mxu0 0.0
  %1149 = vmatpush1.msra.mxu0 0.0
  %1150 = vmatprep.subr.mxu0 0.0
  %1151 = vmatpush1.msra.mxu0 0.0
  %1152 = vmatprep.subr.mxu0 0.0
  %1153 = vmatpush1.msra.mxu0 0.0
  %1154 = vmatprep.subr.mxu0 0.0
  %1155 = vmatpush1.msra.mxu0 0.0
  %1156 = vmatprep.subr.mxu0 0.0
  %1157 = vmatpush1.msra.mxu0 0.0
  %1158 = vmatprep.subr.mxu0 0.0
  %1159 = vmatpush1.msra.mxu0 0.0
  %1160 = vmatprep.subr.mxu0 0.0
  %1161 = vmatpush1.msra.mxu0 0.0
  %1162 = vmatprep.mubr.f32.mxu0 0.0
  %1163 = vmatmul.mubr.f32.gmra.mrb[0].mxu0 %v1025
  %v1164 = vpop.f32.mrb[0].mxu0
  %v1165 = vadd.f32 0.0, %v1164
  %v1166 = vpop.f32.mrb[0].mxu0
  %v1167 = vadd.f32 0.0, %v1166
  %1168 = vdwg.mxu0
  %vm1169 = vcmp.gt.f32.partialorder %v1094, 0.0
  %vm1170 = vcmp.gt.f32.partialorder %v1096, 0.0
  %vm1171 = vcmp.gt.f32.partialorder %v1165, 0.0
  %vm1172 = vcmp.gt.f32.partialorder %v1167, 0.0
  %v1173 = vmul.f32 %v1094, 1.442695
  %v1174 = vpow.pop %v1173
  %v1175 = vmul.f32 %v1096, 1.442695
  %v1176 = vpow.pop %v1175
  %v1177 = vmul.f32 %v1165, 1.442695
  %v1178 = vpow.pop %v1177
  %v1179 = vmul.f32 %v1167, 1.442695
  %v1180 = vpow.pop %v1179
  %v1181 = vsub.f32 %v1174, 1.0
  %v1182 = vsub.f32 %v1176, 1.0
  %v1183 = vsub.f32 %v1178, 1.0
  %v1184 = vsub.f32 %v1180, 1.0
  %v1185 = vmul.f32 %v1181, 1.6732632
  %v1186 = vmul.f32 %v1182, 1.6732632
  %v1187 = vmul.f32 %v1183, 1.6732632
  %v1188 = vmul.f32 %v1184, 1.6732632
  %v1189 = vsel %vm1169, %v1094, %v1185
  %v1190 = vsel %vm1170, %v1096, %v1186
  %v1191 = vsel %vm1171, %v1165, %v1187
  %v1192 = vsel %vm1172, %v1167, %v1188
  %v1193 = vmul.f32 %v1189, 1.050701
  %v1194 = vmul.f32 %v1190, 1.050701
  %v1195 = vmul.f32 %v1191, 1.050701
  %v1196 = vmul.f32 %v1192, 1.050701
  %1197 = vst [vmem:[%s2] sm:$0xff] %v1193
  %1198 = vst [vmem:[%s2 + $0x8] sm:$0xff] %v1194
  %1199 = vst [vmem:[%s2 + $0x10] sm:$0xff] %v1195
  %1200 = vst [vmem:[%s2 + $0x18] sm:$0xff] %v1196
  // Predicated region
  $region10: #{forward.1} parent=0 // pred_check
    _
  $region11: #{forward.1} parent=0 // pred_check_branch
    %1202 = sbr.rel (0) target = $region13
  $region12: #{forward.1} parent=0 // pred_region
    _
  $region13: #{forward.1} parent=0 // pred_fallthru
    _
  // Predicated region
  $region14: #{forward.1} parent=0 // pred_check
    _
  $region15: #{forward.1} parent=0 // pred_check_branch
    %1204 = sbr.rel (0) target = $region17
  $region16: #{forward.1} parent=0 // pred_region
    _
  $region17: #{forward.1} parent=0 // pred_fallthru
    _

</llo_original>
